<compile_context>
chip_gen: v6e
topology: v6e:2x2x1
jax: 0.10.0
libtpu: 0.0.40
codegen_flags: <defaults>
</compile_context>

<pallas_src>
import functools
import math

import jax
import jax.numpy as jnp
from jax.experimental import pallas as pl
from jax.experimental.pallas import tpu as pltpu


def _layer_norm(x, gamma, beta, eps=1e-6):
    mean = jnp.mean(x, axis=-1, keepdims=True)
    var = jnp.mean((x - mean) ** 2, axis=-1, keepdims=True)
    return (x - mean) * jax.lax.rsqrt(var + eps) * gamma + beta


def encoder_layer_kernel(x_ref, mask_ref,
                         gamma_ref, beta_ref,
                         wqkv_ref, bqkv_ref,
                         wo_ref, bo_ref,
                         w1_ref, b1_ref, w2_ref, b2_ref,
                         out_ref, *, n_heads):
    Bt, S, H = x_ref.shape
    hd = H // n_heads
    cdt = x_ref.dtype          # matmul-operand dtype (== input dtype)

    # Batch block folded into the matmul M dimension.
    x32 = x_ref[...].astype(jnp.float32).reshape(Bt * S, H)
    gamma = gamma_ref[...]                      # (1, H) f32
    beta = beta_ref[...]                        # (1, H) f32

    # Additive mask bias, computed ONCE per grid step (not per head).
    # Matches masked_fill(mask==0, -1e10) except for fully-masked (degenerate) rows.
    bias = jnp.where(mask_ref[...] > 0.0, 0.0, -1e10).astype(jnp.float32)   # (Bt, 1, S)

    # ---- pre-LN + fused QKV projection (one (Bt*S,H) x (H,3H) MXU matmul) ----
    # NOTE: the Q columns of wqkv/bqkv are pre-scaled by 1/sqrt(head_dim) in the
    # wrapper, so no per-head score scaling is needed below.
    xn = _layer_norm(x32, gamma, beta).astype(cdt)
    qkv = jnp.dot(xn, wqkv_ref[...], preferred_element_type=jnp.float32) + bqkv_ref[...]
    q = qkv[:, 0 * H:1 * H].reshape(Bt, S, H)
    k = qkv[:, 1 * H:2 * H].reshape(Bt, S, H)
    v = qkv[:, 2 * H:3 * H].reshape(Bt, S, H)

    # ---- multi-head attention, batched over the batch block.
    #      The O-projection is folded into a per-head MXU accumulate (no concat).
    acc = jnp.zeros((Bt * S, H), jnp.float32)
    for h in range(n_heads):
        sl = slice(h * hd, (h + 1) * hd)
        qh = q[:, :, sl].astype(cdt)            # (Bt, S, hd), already scaled
        kh = k[:, :, sl].astype(cdt)
        vh = v[:, :, sl].astype(cdt)
        # contract over head_dim directly — no kh.T materialized
        s = jnp.einsum("bqd,bkd->bqk", qh, kh,
                       preferred_element_type=jnp.float32) + bias            # (Bt, S, S)
        m = jnp.max(s, axis=-1, keepdims=True)
        p = jnp.exp(s - m)
        p = p * pl.reciprocal(jnp.sum(p, axis=-1, keepdims=True), approx=True)
        ctx = jnp.einsum("bqk,bkd->bqd", p.astype(cdt), vh,
                         preferred_element_type=jnp.float32)                 # (Bt, S, hd)
        acc = acc + jnp.dot(ctx.reshape(Bt * S, hd).astype(cdt), wo_ref[sl, :],
                            preferred_element_type=jnp.float32)
    # TODO(synk): attention / FFN dropout omitted (inference / p=0 semantics).

    y = x32 + acc + bo_ref[...]                 # residual 1 (f32)

    # ---- pre-LN + position-wise FFN + residual (shared LayerNorm params) ----
    yn = _layer_norm(y, gamma, beta).astype(cdt)
    h1 = jnp.dot(yn, w1_ref[...], preferred_element_type=jnp.float32) + b1_ref[...]
    h1 = jnp.maximum(h1, 0.0)                   # ReLU
    ffn = jnp.dot(h1.astype(cdt), w2_ref[...], preferred_element_type=jnp.float32) + b2_ref[...]

    out_ref[...] = (y + ffn).reshape(Bt, S, H).astype(out_ref.dtype)


def encoder_layer(x, mask, params, n_heads, *, block_b=None):
    B, S, H = x.shape
    F = params["w1"].shape[1]
    hd = H // n_heads
    cdt = x.dtype
    f32 = jnp.float32

    # Block of batch rows per grid step: aim for >=128 matmul rows (M = block_b*S).
    if block_b is None:
        block_b = min(B, max(1, 128 // S))
    while B % block_b:
        block_b -= 1
    grid = (B // block_b,)

    # Fused QKV weight with the attention scale folded into the Q columns
    # (one-time parameter prep, zero in-kernel cost).  Matmul operands in the
    # input dtype, biases / LN params in f32.
    scale = 1.0 / math.sqrt(hd)
    wqkv = jnp.concatenate([params["wq"] * scale, params["wk"], params["wv"]],
                           axis=1).astype(cdt)
    bqkv = jnp.concatenate([params["bq"] * scale, params["bk"], params["bv"]]
                           ).reshape(1, 3 * H).astype(f32)
    wo = params["wo"].astype(cdt)
    bo = params["bo"].reshape(1, H).astype(f32)
    w1 = params["w1"].astype(cdt)
    b1 = params["b1"].reshape(1, F).astype(f32)
    w2 = params["w2"].astype(cdt)
    b2 = params["b2"].reshape(1, H).astype(f32)
    gamma = params["gamma"].reshape(1, H).astype(f32)
    beta = params["beta"].reshape(1, H).astype(f32)
    mask3 = mask.reshape(B, 1, S).astype(f32)

    def rep(shape):
        # parameter tensors: same full block at every grid step (Pallas skips
        # the redundant re-fetch when the block index is unchanged)
        return pl.BlockSpec(shape, lambda b: tuple(0 for _ in shape))

    # Explicit scoped-VMEM budget: double-buffered blocks + intermediates, with headroom.
    isz = jnp.dtype(cdt).itemsize
    weight_bytes = (wqkv.size + wo.size + w1.size + w2.size) * isz
    small_bytes = (bqkv.size + bo.size + b1.size + b2.size + gamma.size + beta.size) * 4
    io_block_bytes = block_b * S * (2 * H * isz) + block_b * S * 4
    interm_bytes = block_b * S * ((3 * H + 8 * H + 2 * F) * 4 + 3 * S * 4)
    vmem_limit = 2 * (weight_bytes + small_bytes + io_block_bytes) + interm_bytes
    vmem_limit = int(min(64 << 20, max(32 << 20, 2 * vmem_limit)))  # 64 MiB cap = v7x physical VMEM

    grid_spec = pltpu.PrefetchScalarGridSpec(
        num_scalar_prefetch=0,
        grid=grid,
        in_specs=[
            pl.BlockSpec((block_b, S, H), lambda b: (b, 0, 0)),   # x
            pl.BlockSpec((block_b, 1, S), lambda b: (b, 0, 0)),   # mask
            rep((1, H)), rep((1, H)),                             # gamma, beta
            rep((H, 3 * H)), rep((1, 3 * H)),                     # wqkv, bqkv
            rep((H, H)), rep((1, H)),                             # wo, bo
            rep((H, F)), rep((1, F)),                             # w1, b1
            rep((F, H)), rep((1, H)),                             # w2, b2
        ],
        out_specs=pl.BlockSpec((block_b, S, H), lambda b: (b, 0, 0)),
    )

    return pl.pallas_call(
        functools.partial(encoder_layer_kernel, n_heads=n_heads),
        out_shape=jax.ShapeDtypeStruct((B, S, H), x.dtype),
        grid_spec=grid_spec,
        compiler_params=pltpu.CompilerParams(
            dimension_semantics=("parallel",),
            vmem_limit_bytes=vmem_limit),
    )(x, mask3, gamma, beta, wqkv, bqkv, wo, bo, w1, b1, w2, b2)


def encoder_layer_ref(x, mask, params, n_heads):
    """Pure-JAX reference with the PyTorch module's semantics."""
    B, S, H = x.shape
    hd = H // n_heads
    gamma, beta = params["gamma"], params["beta"]

    def ln(t):
        mu = jnp.mean(t, axis=-1, keepdims=True)
        var = jnp.mean((t - mu) ** 2, axis=-1, keepdims=True)
        return (t - mu) * jax.lax.rsqrt(var + 1e-6) * gamma + beta

    xn = ln(x)
    q = xn @ params["wq"] + params["bq"]
    k = xn @ params["wk"] + params["bk"]
    v = xn @ params["wv"] + params["bv"]
    q = q.reshape(B, S, n_heads, hd).transpose(0, 2, 1, 3)
    k = k.reshape(B, S, n_heads, hd).transpose(0, 2, 1, 3)
    v = v.reshape(B, S, n_heads, hd).transpose(0, 2, 1, 3)
    scores = jnp.einsum("bhqd,bhkd->bhqk", q, k) / jnp.sqrt(jnp.float32(hd))
    scores = jnp.where(mask[:, None, None, :] > 0.0, scores, -1e10)
    p = jax.nn.softmax(scores, axis=-1)
    ctx = jnp.einsum("bhqk,bhkd->bhqd", p, v).transpose(0, 2, 1, 3).reshape(B, S, H)
    y = x + ctx @ params["wo"] + params["bo"]
    yn = ln(y)
    ffn = jnp.maximum(yn @ params["w1"] + params["b1"], 0.0) @ params["w2"] + params["b2"]
    return y + ffn


if __name__ == "__main__":
    B, S, H, NH, F = 2, 8, 32, 4, 64

    key = jax.random.PRNGKey(0)
    keys = jax.random.split(key, 12)

    def init(k, shape, scale=0.05):
        return (scale * jax.random.normal(k, shape)).astype(jnp.float32)

    params = {
        "gamma": jnp.ones((H,), jnp.float32),
        "beta": jnp.zeros((H,), jnp.float32),
        "wq": init(keys[0], (H, H)), "bq": init(keys[1], (H,)),
        "wk": init(keys[2], (H, H)), "bk": init(keys[3], (H,)),
        "wv": init(keys[4], (H, H)), "bv": init(keys[5], (H,)),
        "wo": init(keys[6], (H, H)), "bo": init(keys[7], (H,)),
        "w1": init(keys[8], (H, F)), "b1": init(keys[9], (F,)),
        "w2": init(keys[10], (F, H)), "b2": init(keys[11], (H,)),
    }

    x = jax.random.normal(jax.random.PRNGKey(42), (B, S, H), jnp.float32)
    mask = jnp.ones((B, S), jnp.float32).at[1, 6:].set(0.0)  # pad out last 2 keys of batch 1

    out = jax.block_until_ready(encoder_layer(x, mask, params, NH))
    ref = encoder_layer_ref(x, mask, params, NH)

    assert out.shape == (B, S, H)
    # Tolerance accounts for the EUP approximate reciprocal in the softmax denominator.
    assert jnp.allclose(out, ref, atol=2e-3, rtol=2e-3)
    print("KERNEL_OK")
</pallas_src>

<mosaic_0001>
module attributes {stable_mosaic.version = 11 : i64} {
  func.func @encoder_layer_kernel(%arg0: i32, %arg1: memref<2x8x32xf32, #tpu.memory_space<vmem>>, %arg2: memref<2x1x8xf32, #tpu.memory_space<vmem>>, %arg3: memref<1x32xf32, #tpu.memory_space<vmem>>, %arg4: memref<1x32xf32, #tpu.memory_space<vmem>>, %arg5: memref<32x96xf32, #tpu.memory_space<vmem>>, %arg6: memref<1x96xf32, #tpu.memory_space<vmem>>, %arg7: memref<32x32xf32, #tpu.memory_space<vmem>>, %arg8: memref<1x32xf32, #tpu.memory_space<vmem>>, %arg9: memref<32x64xf32, #tpu.memory_space<vmem>>, %arg10: memref<1x64xf32, #tpu.memory_space<vmem>>, %arg11: memref<64x32xf32, #tpu.memory_space<vmem>>, %arg12: memref<1x32xf32, #tpu.memory_space<vmem>>, %arg13: memref<2x8x32xf32, #tpu.memory_space<vmem>>) attributes {dimension_semantics = [#tpu.dimension_semantics<parallel>], iteration_bounds = array<i64: 1>, scalar_prefetch = 0 : i64, scratch_operands = 0 : i64, tpu.core_type = #tpu.core_type<tc>, window_params = [{transform_indices = @transform_0, window_bounds = array<i64: 2, 8, 32>}, {transform_indices = @transform_1, window_bounds = array<i64: 2, 1, 8>}, {pipeline_mode = #tpu.pipeline_mode<synchronous>, transform_indices = @transform_2, window_bounds = array<i64: 1, 32>}, {pipeline_mode = #tpu.pipeline_mode<synchronous>, transform_indices = @transform_3, window_bounds = array<i64: 1, 32>}, {pipeline_mode = #tpu.pipeline_mode<synchronous>, transform_indices = @transform_4, window_bounds = array<i64: 32, 96>}, {pipeline_mode = #tpu.pipeline_mode<synchronous>, transform_indices = @transform_5, window_bounds = array<i64: 1, 96>}, {pipeline_mode = #tpu.pipeline_mode<synchronous>, transform_indices = @transform_6, window_bounds = array<i64: 32, 32>}, {pipeline_mode = #tpu.pipeline_mode<synchronous>, transform_indices = @transform_7, window_bounds = array<i64: 1, 32>}, {pipeline_mode = #tpu.pipeline_mode<synchronous>, transform_indices = @transform_8, window_bounds = array<i64: 32, 64>}, {pipeline_mode = #tpu.pipeline_mode<synchronous>, transform_indices = @transform_9, window_bounds = array<i64: 1, 64>}, {pipeline_mode = #tpu.pipeline_mode<synchronous>, transform_indices = @transform_10, window_bounds = array<i64: 64, 32>}, {pipeline_mode = #tpu.pipeline_mode<synchronous>, transform_indices = @transform_11, window_bounds = array<i64: 1, 32>}, {transform_indices = @transform_12, window_bounds = array<i64: 2, 8, 32>}]} {
    %c0 = arith.constant 0 : index
    %c0_0 = arith.constant 0 : index
    %c0_1 = arith.constant 0 : index
    %0 = vector.load %arg1[%c0, %c0_0, %c0_1] : memref<2x8x32xf32, #tpu.memory_space<vmem>>, vector<2x8x32xf32>
    %1 = vector.shape_cast %0 : vector<2x8x32xf32> to vector<16x32xf32>
    %c0_2 = arith.constant 0 : index
    %c0_3 = arith.constant 0 : index
    %2 = vector.load %arg3[%c0_2, %c0_3] : memref<1x32xf32, #tpu.memory_space<vmem>>, vector<1x32xf32>
    %c0_4 = arith.constant 0 : index
    %c0_5 = arith.constant 0 : index
    %3 = vector.load %arg4[%c0_4, %c0_5] : memref<1x32xf32, #tpu.memory_space<vmem>>, vector<1x32xf32>
    %c0_6 = arith.constant 0 : index
    %c0_7 = arith.constant 0 : index
    %c0_8 = arith.constant 0 : index
    %4 = vector.load %arg2[%c0_6, %c0_7, %c0_8] : memref<2x1x8xf32, #tpu.memory_space<vmem>>, vector<2x1x8xf32>
    %cst = arith.constant 0.000000e+00 : f32
    %5 = vector.broadcast %cst : f32 to vector<2x1x8xf32>
    %6 = arith.cmpf ogt, %4, %5 : vector<2x1x8xf32>
    %cst_9 = arith.constant 0.000000e+00 : f32
    %cst_10 = arith.constant -1.000000e+10 : f32
    %7 = vector.broadcast %cst_9 : f32 to vector<2x1x8xf32>
    %8 = vector.broadcast %cst_10 : f32 to vector<2x1x8xf32>
    %9 = arith.select %6, %7, %8 : vector<2x1x8xi1>, vector<2x1x8xf32>
    %cst_11 = arith.constant dense<0.000000e+00> : vector<16xf32>
    %10 = vector.multi_reduction <add>, %1, %cst_11 [1] : vector<16x32xf32> to vector<16xf32>
    %11 = vector.shape_cast %10 : vector<16xf32> to vector<16x1xf32>
    %cst_12 = arith.constant 3.200000e+01 : f32
    %12 = vector.broadcast %cst_12 : f32 to vector<16x1xf32>
    %13 = arith.divf %11, %12 : vector<16x1xf32>
    %14 = vector.broadcast %13 : vector<16x1xf32> to vector<16x32xf32>
    %15 = arith.subf %1, %14 : vector<16x32xf32>
    %16 = arith.mulf %15, %15 : vector<16x32xf32>
    %cst_13 = arith.constant dense<0.000000e+00> : vector<16xf32>
    %17 = vector.multi_reduction <add>, %16, %cst_13 [1] : vector<16x32xf32> to vector<16xf32>
    %18 = vector.shape_cast %17 : vector<16xf32> to vector<16x1xf32>
    %cst_14 = arith.constant 3.200000e+01 : f32
    %19 = vector.broadcast %cst_14 : f32 to vector<16x1xf32>
    %20 = arith.divf %18, %19 : vector<16x1xf32>
    %21 = vector.broadcast %13 : vector<16x1xf32> to vector<16x32xf32>
    %22 = arith.subf %1, %21 : vector<16x32xf32>
    %cst_15 = arith.constant 9.99999997E-7 : f32
    %23 = vector.broadcast %cst_15 : f32 to vector<16x1xf32>
    %24 = arith.addf %20, %23 : vector<16x1xf32>
    %25 = math.rsqrt %24 : vector<16x1xf32>
    %26 = vector.broadcast %25 : vector<16x1xf32> to vector<16x32xf32>
    %27 = arith.mulf %22, %26 : vector<16x32xf32>
    %28 = vector.broadcast %2 : vector<1x32xf32> to vector<16x32xf32>
    %29 = arith.mulf %27, %28 : vector<16x32xf32>
    %30 = vector.broadcast %3 : vector<1x32xf32> to vector<16x32xf32>
    %31 = arith.addf %29, %30 : vector<16x32xf32>
    %c0_16 = arith.constant 0 : index
    %c0_17 = arith.constant 0 : index
    %32 = vector.load %arg5[%c0_16, %c0_17] : memref<32x96xf32, #tpu.memory_space<vmem>>, vector<32x96xf32>
    %cst_18 = arith.constant dense<0.000000e+00> : vector<16x96xf32>
    %33 = tpu.matmul %31, %32, %cst_18 {dimension_numbers = #tpu.dot_dimension_numbers<[1], [0], [0], [1], [0, 0, 1, 1], [], []>} : vector<16x32xf32>, vector<32x96xf32>, vector<16x96xf32> -> vector<16x96xf32>
    %c0_19 = arith.constant 0 : index
    %c0_20 = arith.constant 0 : index
    %34 = vector.load %arg6[%c0_19, %c0_20] : memref<1x96xf32, #tpu.memory_space<vmem>>, vector<1x96xf32>
    %35 = vector.broadcast %34 : vector<1x96xf32> to vector<16x96xf32>
    %36 = arith.addf %33, %35 : vector<16x96xf32>
    %37 = vector.extract_strided_slice %36 {offsets = [0, 0], sizes = [16, 32], strides = [1, 1]} : vector<16x96xf32> to vector<16x32xf32>
    %38 = vector.shape_cast %37 : vector<16x32xf32> to vector<2x8x32xf32>
    %39 = vector.extract_strided_slice %36 {offsets = [0, 32], sizes = [16, 32], strides = [1, 1]} : vector<16x96xf32> to vector<16x32xf32>
    %40 = vector.shape_cast %39 : vector<16x32xf32> to vector<2x8x32xf32>
    %41 = vector.extract_strided_slice %36 {offsets = [0, 64], sizes = [16, 32], strides = [1, 1]} : vector<16x96xf32> to vector<16x32xf32>
    %42 = vector.shape_cast %41 : vector<16x32xf32> to vector<2x8x32xf32>
    %cst_21 = arith.constant 0.000000e+00 : f32
    %43 = vector.broadcast %cst_21 : f32 to vector<16x32xf32>
    %44 = vector.extract_strided_slice %38 {offsets = [0, 0, 0], sizes = [2, 8, 8], strides = [1, 1, 1]} : vector<2x8x32xf32> to vector<2x8x8xf32>
    %45 = vector.extract_strided_slice %40 {offsets = [0, 0, 0], sizes = [2, 8, 8], strides = [1, 1, 1]} : vector<2x8x32xf32> to vector<2x8x8xf32>
    %46 = vector.extract_strided_slice %42 {offsets = [0, 0, 0], sizes = [2, 8, 8], strides = [1, 1, 1]} : vector<2x8x32xf32> to vector<2x8x8xf32>
    "tpu.trace_start"() <{level = 10 : i32, message = "bqd,bkd->bqk"}> : () -> ()
    %cst_22 = arith.constant dense<0.000000e+00> : vector<2x8x8xf32>
    %47 = tpu.matmul %44, %45, %cst_22 {dimension_numbers = #tpu.dot_dimension_numbers<[2], [2], [1], [1], [0, 0, 0, 1, 1, 1], [0], [0]>} : vector<2x8x8xf32>, vector<2x8x8xf32>, vector<2x8x8xf32> -> vector<2x8x8xf32>
    "tpu.trace_stop"() : () -> ()
    %48 = vector.broadcast %9 : vector<2x1x8xf32> to vector<2x8x8xf32>
    %49 = arith.addf %47, %48 : vector<2x8x8xf32>
    %cst_23 = arith.constant dense<0xFF800000> : vector<2x8xf32>
    %50 = vector.multi_reduction <maximumf>, %49, %cst_23 [2] : vector<2x8x8xf32> to vector<2x8xf32>
    %51 = vector.shape_cast %50 : vector<2x8xf32> to vector<2x8x1xf32>
    %52 = vector.broadcast %51 : vector<2x8x1xf32> to vector<2x8x8xf32>
    %53 = arith.subf %49, %52 : vector<2x8x8xf32>
    %54 = math.exp %53 : vector<2x8x8xf32>
    %cst_24 = arith.constant dense<0.000000e+00> : vector<2x8xf32>
    %55 = vector.multi_reduction <add>, %54, %cst_24 [2] : vector<2x8x8xf32> to vector<2x8xf32>
    %56 = vector.shape_cast %55 : vector<2x8xf32> to vector<2x8x1xf32>
    %57 = tpu.reciprocal %56 {approx = true} : vector<2x8x1xf32> -> vector<2x8x1xf32>
    %58 = vector.broadcast %57 : vector<2x8x1xf32> to vector<2x8x8xf32>
    %59 = arith.mulf %54, %58 : vector<2x8x8xf32>
    "tpu.trace_start"() <{level = 10 : i32, message = "bqk,bkd->bqd"}> : () -> ()
    %cst_25 = arith.constant dense<0.000000e+00> : vector<2x8x8xf32>
    %60 = tpu.matmul %59, %46, %cst_25 {dimension_numbers = #tpu.dot_dimension_numbers<[2], [1], [1], [2], [0, 0, 0, 1, 1, 2], [0], [0]>} : vector<2x8x8xf32>, vector<2x8x8xf32>, vector<2x8x8xf32> -> vector<2x8x8xf32>
    "tpu.trace_stop"() : () -> ()
    %61 = vector.shape_cast %60 : vector<2x8x8xf32> to vector<16x8xf32>
    %c0_26 = arith.constant 0 : index
    %c0_27 = arith.constant 0 : index
    %62 = vector.load %arg7[%c0_26, %c0_27] : memref<32x32xf32, #tpu.memory_space<vmem>>, vector<8x32xf32>
    %cst_28 = arith.constant dense<0.000000e+00> : vector<16x32xf32>
    %63 = tpu.matmul %61, %62, %cst_28 {dimension_numbers = #tpu.dot_dimension_numbers<[1], [0], [0], [1], [0, 0, 1, 1], [], []>} : vector<16x8xf32>, vector<8x32xf32>, vector<16x32xf32> -> vector<16x32xf32>
    %64 = arith.addf %43, %63 : vector<16x32xf32>
    %65 = vector.extract_strided_slice %38 {offsets = [0, 0, 8], sizes = [2, 8, 8], strides = [1, 1, 1]} : vector<2x8x32xf32> to vector<2x8x8xf32>
    %66 = vector.extract_strided_slice %40 {offsets = [0, 0, 8], sizes = [2, 8, 8], strides = [1, 1, 1]} : vector<2x8x32xf32> to vector<2x8x8xf32>
    %67 = vector.extract_strided_slice %42 {offsets = [0, 0, 8], sizes = [2, 8, 8], strides = [1, 1, 1]} : vector<2x8x32xf32> to vector<2x8x8xf32>
    "tpu.trace_start"() <{level = 10 : i32, message = "bqd,bkd->bqk"}> : () -> ()
    %cst_29 = arith.constant dense<0.000000e+00> : vector<2x8x8xf32>
    %68 = tpu.matmul %65, %66, %cst_29 {dimension_numbers = #tpu.dot_dimension_numbers<[2], [2], [1], [1], [0, 0, 0, 1, 1, 1], [0], [0]>} : vector<2x8x8xf32>, vector<2x8x8xf32>, vector<2x8x8xf32> -> vector<2x8x8xf32>
    "tpu.trace_stop"() : () -> ()
    %69 = vector.broadcast %9 : vector<2x1x8xf32> to vector<2x8x8xf32>
    %70 = arith.addf %68, %69 : vector<2x8x8xf32>
    %cst_30 = arith.constant dense<0xFF800000> : vector<2x8xf32>
    %71 = vector.multi_reduction <maximumf>, %70, %cst_30 [2] : vector<2x8x8xf32> to vector<2x8xf32>
    %72 = vector.shape_cast %71 : vector<2x8xf32> to vector<2x8x1xf32>
    %73 = vector.broadcast %72 : vector<2x8x1xf32> to vector<2x8x8xf32>
    %74 = arith.subf %70, %73 : vector<2x8x8xf32>
    %75 = math.exp %74 : vector<2x8x8xf32>
    %cst_31 = arith.constant dense<0.000000e+00> : vector<2x8xf32>
    %76 = vector.multi_reduction <add>, %75, %cst_31 [2] : vector<2x8x8xf32> to vector<2x8xf32>
    %77 = vector.shape_cast %76 : vector<2x8xf32> to vector<2x8x1xf32>
    %78 = tpu.reciprocal %77 {approx = true} : vector<2x8x1xf32> -> vector<2x8x1xf32>
    %79 = vector.broadcast %78 : vector<2x8x1xf32> to vector<2x8x8xf32>
    %80 = arith.mulf %75, %79 : vector<2x8x8xf32>
    "tpu.trace_start"() <{level = 10 : i32, message = "bqk,bkd->bqd"}> : () -> ()
    %cst_32 = arith.constant dense<0.000000e+00> : vector<2x8x8xf32>
    %81 = tpu.matmul %80, %67, %cst_32 {dimension_numbers = #tpu.dot_dimension_numbers<[2], [1], [1], [2], [0, 0, 0, 1, 1, 2], [0], [0]>} : vector<2x8x8xf32>, vector<2x8x8xf32>, vector<2x8x8xf32> -> vector<2x8x8xf32>
    "tpu.trace_stop"() : () -> ()
    %82 = vector.shape_cast %81 : vector<2x8x8xf32> to vector<16x8xf32>
    %c8 = arith.constant 8 : index
    %c0_33 = arith.constant 0 : index
    %83 = vector.load %arg7[%c8, %c0_33] : memref<32x32xf32, #tpu.memory_space<vmem>>, vector<8x32xf32>
    %cst_34 = arith.constant dense<0.000000e+00> : vector<16x32xf32>
    %84 = tpu.matmul %82, %83, %cst_34 {dimension_numbers = #tpu.dot_dimension_numbers<[1], [0], [0], [1], [0, 0, 1, 1], [], []>} : vector<16x8xf32>, vector<8x32xf32>, vector<16x32xf32> -> vector<16x32xf32>
    %85 = arith.addf %64, %84 : vector<16x32xf32>
    %86 = vector.extract_strided_slice %38 {offsets = [0, 0, 16], sizes = [2, 8, 8], strides = [1, 1, 1]} : vector<2x8x32xf32> to vector<2x8x8xf32>
    %87 = vector.extract_strided_slice %40 {offsets = [0, 0, 16], sizes = [2, 8, 8], strides = [1, 1, 1]} : vector<2x8x32xf32> to vector<2x8x8xf32>
    %88 = vector.extract_strided_slice %42 {offsets = [0, 0, 16], sizes = [2, 8, 8], strides = [1, 1, 1]} : vector<2x8x32xf32> to vector<2x8x8xf32>
    "tpu.trace_start"() <{level = 10 : i32, message = "bqd,bkd->bqk"}> : () -> ()
    %cst_35 = arith.constant dense<0.000000e+00> : vector<2x8x8xf32>
    %89 = tpu.matmul %86, %87, %cst_35 {dimension_numbers = #tpu.dot_dimension_numbers<[2], [2], [1], [1], [0, 0, 0, 1, 1, 1], [0], [0]>} : vector<2x8x8xf32>, vector<2x8x8xf32>, vector<2x8x8xf32> -> vector<2x8x8xf32>
    "tpu.trace_stop"() : () -> ()
    %90 = vector.broadcast %9 : vector<2x1x8xf32> to vector<2x8x8xf32>
    %91 = arith.addf %89, %90 : vector<2x8x8xf32>
    %cst_36 = arith.constant dense<0xFF800000> : vector<2x8xf32>
    %92 = vector.multi_reduction <maximumf>, %91, %cst_36 [2] : vector<2x8x8xf32> to vector<2x8xf32>
    %93 = vector.shape_cast %92 : vector<2x8xf32> to vector<2x8x1xf32>
    %94 = vector.broadcast %93 : vector<2x8x1xf32> to vector<2x8x8xf32>
    %95 = arith.subf %91, %94 : vector<2x8x8xf32>
    %96 = math.exp %95 : vector<2x8x8xf32>
    %cst_37 = arith.constant dense<0.000000e+00> : vector<2x8xf32>
    %97 = vector.multi_reduction <add>, %96, %cst_37 [2] : vector<2x8x8xf32> to vector<2x8xf32>
    %98 = vector.shape_cast %97 : vector<2x8xf32> to vector<2x8x1xf32>
    %99 = tpu.reciprocal %98 {approx = true} : vector<2x8x1xf32> -> vector<2x8x1xf32>
    %100 = vector.broadcast %99 : vector<2x8x1xf32> to vector<2x8x8xf32>
    %101 = arith.mulf %96, %100 : vector<2x8x8xf32>
    "tpu.trace_start"() <{level = 10 : i32, message = "bqk,bkd->bqd"}> : () -> ()
    %cst_38 = arith.constant dense<0.000000e+00> : vector<2x8x8xf32>
    %102 = tpu.matmul %101, %88, %cst_38 {dimension_numbers = #tpu.dot_dimension_numbers<[2], [1], [1], [2], [0, 0, 0, 1, 1, 2], [0], [0]>} : vector<2x8x8xf32>, vector<2x8x8xf32>, vector<2x8x8xf32> -> vector<2x8x8xf32>
    "tpu.trace_stop"() : () -> ()
    %103 = vector.shape_cast %102 : vector<2x8x8xf32> to vector<16x8xf32>
    %c16 = arith.constant 16 : index
    %c0_39 = arith.constant 0 : index
    %104 = vector.load %arg7[%c16, %c0_39] : memref<32x32xf32, #tpu.memory_space<vmem>>, vector<8x32xf32>
    %cst_40 = arith.constant dense<0.000000e+00> : vector<16x32xf32>
    %105 = tpu.matmul %103, %104, %cst_40 {dimension_numbers = #tpu.dot_dimension_numbers<[1], [0], [0], [1], [0, 0, 1, 1], [], []>} : vector<16x8xf32>, vector<8x32xf32>, vector<16x32xf32> -> vector<16x32xf32>
    %106 = arith.addf %85, %105 : vector<16x32xf32>
    %107 = vector.extract_strided_slice %38 {offsets = [0, 0, 24], sizes = [2, 8, 8], strides = [1, 1, 1]} : vector<2x8x32xf32> to vector<2x8x8xf32>
    %108 = vector.extract_strided_slice %40 {offsets = [0, 0, 24], sizes = [2, 8, 8], strides = [1, 1, 1]} : vector<2x8x32xf32> to vector<2x8x8xf32>
    %109 = vector.extract_strided_slice %42 {offsets = [0, 0, 24], sizes = [2, 8, 8], strides = [1, 1, 1]} : vector<2x8x32xf32> to vector<2x8x8xf32>
    "tpu.trace_start"() <{level = 10 : i32, message = "bqd,bkd->bqk"}> : () -> ()
    %cst_41 = arith.constant dense<0.000000e+00> : vector<2x8x8xf32>
    %110 = tpu.matmul %107, %108, %cst_41 {dimension_numbers = #tpu.dot_dimension_numbers<[2], [2], [1], [1], [0, 0, 0, 1, 1, 1], [0], [0]>} : vector<2x8x8xf32>, vector<2x8x8xf32>, vector<2x8x8xf32> -> vector<2x8x8xf32>
    "tpu.trace_stop"() : () -> ()
    %111 = vector.broadcast %9 : vector<2x1x8xf32> to vector<2x8x8xf32>
    %112 = arith.addf %110, %111 : vector<2x8x8xf32>
    %cst_42 = arith.constant dense<0xFF800000> : vector<2x8xf32>
    %113 = vector.multi_reduction <maximumf>, %112, %cst_42 [2] : vector<2x8x8xf32> to vector<2x8xf32>
    %114 = vector.shape_cast %113 : vector<2x8xf32> to vector<2x8x1xf32>
    %115 = vector.broadcast %114 : vector<2x8x1xf32> to vector<2x8x8xf32>
    %116 = arith.subf %112, %115 : vector<2x8x8xf32>
    %117 = math.exp %116 : vector<2x8x8xf32>
    %cst_43 = arith.constant dense<0.000000e+00> : vector<2x8xf32>
    %118 = vector.multi_reduction <add>, %117, %cst_43 [2] : vector<2x8x8xf32> to vector<2x8xf32>
    %119 = vector.shape_cast %118 : vector<2x8xf32> to vector<2x8x1xf32>
    %120 = tpu.reciprocal %119 {approx = true} : vector<2x8x1xf32> -> vector<2x8x1xf32>
    %121 = vector.broadcast %120 : vector<2x8x1xf32> to vector<2x8x8xf32>
    %122 = arith.mulf %117, %121 : vector<2x8x8xf32>
    "tpu.trace_start"() <{level = 10 : i32, message = "bqk,bkd->bqd"}> : () -> ()
    %cst_44 = arith.constant dense<0.000000e+00> : vector<2x8x8xf32>
    %123 = tpu.matmul %122, %109, %cst_44 {dimension_numbers = #tpu.dot_dimension_numbers<[2], [1], [1], [2], [0, 0, 0, 1, 1, 2], [0], [0]>} : vector<2x8x8xf32>, vector<2x8x8xf32>, vector<2x8x8xf32> -> vector<2x8x8xf32>
    "tpu.trace_stop"() : () -> ()
    %124 = vector.shape_cast %123 : vector<2x8x8xf32> to vector<16x8xf32>
    %c24 = arith.constant 24 : index
    %c0_45 = arith.constant 0 : index
    %125 = vector.load %arg7[%c24, %c0_45] : memref<32x32xf32, #tpu.memory_space<vmem>>, vector<8x32xf32>
    %cst_46 = arith.constant dense<0.000000e+00> : vector<16x32xf32>
    %126 = tpu.matmul %124, %125, %cst_46 {dimension_numbers = #tpu.dot_dimension_numbers<[1], [0], [0], [1], [0, 0, 1, 1], [], []>} : vector<16x8xf32>, vector<8x32xf32>, vector<16x32xf32> -> vector<16x32xf32>
    %127 = arith.addf %106, %126 : vector<16x32xf32>
    %128 = arith.addf %1, %127 : vector<16x32xf32>
    %c0_47 = arith.constant 0 : index
    %c0_48 = arith.constant 0 : index
    %129 = vector.load %arg8[%c0_47, %c0_48] : memref<1x32xf32, #tpu.memory_space<vmem>>, vector<1x32xf32>
    %130 = vector.broadcast %129 : vector<1x32xf32> to vector<16x32xf32>
    %131 = arith.addf %128, %130 : vector<16x32xf32>
    %cst_49 = arith.constant dense<0.000000e+00> : vector<16xf32>
    %132 = vector.multi_reduction <add>, %131, %cst_49 [1] : vector<16x32xf32> to vector<16xf32>
    %133 = vector.shape_cast %132 : vector<16xf32> to vector<16x1xf32>
    %cst_50 = arith.constant 3.200000e+01 : f32
    %134 = vector.broadcast %cst_50 : f32 to vector<16x1xf32>
    %135 = arith.divf %133, %134 : vector<16x1xf32>
    %136 = vector.broadcast %135 : vector<16x1xf32> to vector<16x32xf32>
    %137 = arith.subf %131, %136 : vector<16x32xf32>
    %138 = arith.mulf %137, %137 : vector<16x32xf32>
    %cst_51 = arith.constant dense<0.000000e+00> : vector<16xf32>
    %139 = vector.multi_reduction <add>, %138, %cst_51 [1] : vector<16x32xf32> to vector<16xf32>
    %140 = vector.shape_cast %139 : vector<16xf32> to vector<16x1xf32>
    %cst_52 = arith.constant 3.200000e+01 : f32
    %141 = vector.broadcast %cst_52 : f32 to vector<16x1xf32>
    %142 = arith.divf %140, %141 : vector<16x1xf32>
    %143 = vector.broadcast %135 : vector<16x1xf32> to vector<16x32xf32>
    %144 = arith.subf %131, %143 : vector<16x32xf32>
    %cst_53 = arith.constant 9.99999997E-7 : f32
    %145 = vector.broadcast %cst_53 : f32 to vector<16x1xf32>
    %146 = arith.addf %142, %145 : vector<16x1xf32>
    %147 = math.rsqrt %146 : vector<16x1xf32>
    %148 = vector.broadcast %147 : vector<16x1xf32> to vector<16x32xf32>
    %149 = arith.mulf %144, %148 : vector<16x32xf32>
    %150 = vector.broadcast %2 : vector<1x32xf32> to vector<16x32xf32>
    %151 = arith.mulf %149, %150 : vector<16x32xf32>
    %152 = vector.broadcast %3 : vector<1x32xf32> to vector<16x32xf32>
    %153 = arith.addf %151, %152 : vector<16x32xf32>
    %c0_54 = arith.constant 0 : index
    %c0_55 = arith.constant 0 : index
    %154 = vector.load %arg9[%c0_54, %c0_55] : memref<32x64xf32, #tpu.memory_space<vmem>>, vector<32x64xf32>
    %cst_56 = arith.constant dense<0.000000e+00> : vector<16x64xf32>
    %155 = tpu.matmul %153, %154, %cst_56 {dimension_numbers = #tpu.dot_dimension_numbers<[1], [0], [0], [1], [0, 0, 1, 1], [], []>} : vector<16x32xf32>, vector<32x64xf32>, vector<16x64xf32> -> vector<16x64xf32>
    %c0_57 = arith.constant 0 : index
    %c0_58 = arith.constant 0 : index
    %156 = vector.load %arg10[%c0_57, %c0_58] : memref<1x64xf32, #tpu.memory_space<vmem>>, vector<1x64xf32>
    %157 = vector.broadcast %156 : vector<1x64xf32> to vector<16x64xf32>
    %158 = arith.addf %155, %157 : vector<16x64xf32>
    %cst_59 = arith.constant 0.000000e+00 : f32
    %159 = vector.broadcast %cst_59 : f32 to vector<16x64xf32>
    %160 = arith.maximumf %158, %159 : vector<16x64xf32>
    %c0_60 = arith.constant 0 : index
    %c0_61 = arith.constant 0 : index
    %161 = vector.load %arg11[%c0_60, %c0_61] : memref<64x32xf32, #tpu.memory_space<vmem>>, vector<64x32xf32>
    %cst_62 = arith.constant dense<0.000000e+00> : vector<16x32xf32>
    %162 = tpu.matmul %160, %161, %cst_62 {dimension_numbers = #tpu.dot_dimension_numbers<[1], [0], [0], [1], [0, 0, 1, 1], [], []>} : vector<16x64xf32>, vector<64x32xf32>, vector<16x32xf32> -> vector<16x32xf32>
    %c0_63 = arith.constant 0 : index
    %c0_64 = arith.constant 0 : index
    %163 = vector.load %arg12[%c0_63, %c0_64] : memref<1x32xf32, #tpu.memory_space<vmem>>, vector<1x32xf32>
    %164 = vector.broadcast %163 : vector<1x32xf32> to vector<16x32xf32>
    %165 = arith.addf %162, %164 : vector<16x32xf32>
    %166 = arith.addf %131, %165 : vector<16x32xf32>
    %167 = vector.shape_cast %166 : vector<16x32xf32> to vector<2x8x32xf32>
    %c0_65 = arith.constant 0 : index
    %c0_66 = arith.constant 0 : index
    %c0_67 = arith.constant 0 : index
    %168 = vector.load %arg13[%c0_65, %c0_66, %c0_67] : memref<2x8x32xf32, #tpu.memory_space<vmem>>, vector<2x8x32xf32>
    tpu.vector_store %arg13[%c0_65, %c0_66, %c0_67], %167 {strides = array<i32>} : memref<2x8x32xf32, #tpu.memory_space<vmem>>, vector<2x8x32xf32>,
    return
  }
  func.func @transform_0(%arg0: i32) -> (i32, i32, i32) {
    %c0_i32 = arith.constant 0 : i32
    %c0_i32_0 = arith.constant 0 : i32
    %c0_i32_1 = arith.constant 0 : i32
    return %arg0, %c0_i32, %c0_i32_0 : i32, i32, i32
  }
  func.func @transform_1(%arg0: i32) -> (i32, i32, i32) {
    %c0_i32 = arith.constant 0 : i32
    %c0_i32_0 = arith.constant 0 : i32
    %c0_i32_1 = arith.constant 0 : i32
    return %arg0, %c0_i32, %c0_i32_0 : i32, i32, i32
  }
  func.func @transform_2(%arg0: i32) -> (i32, i32) {
    %c0_i32 = arith.constant 0 : i32
    %c0_i32_0 = arith.constant 0 : i32
    %c0_i32_1 = arith.constant 0 : i32
    return %c0_i32, %c0_i32_0 : i32, i32
  }
  func.func @transform_3(%arg0: i32) -> (i32, i32) {
    %c0_i32 = arith.constant 0 : i32
    %c0_i32_0 = arith.constant 0 : i32
    %c0_i32_1 = arith.constant 0 : i32
    return %c0_i32, %c0_i32_0 : i32, i32
  }
  func.func @transform_4(%arg0: i32) -> (i32, i32) {
    %c0_i32 = arith.constant 0 : i32
    %c0_i32_0 = arith.constant 0 : i32
    %c0_i32_1 = arith.constant 0 : i32
    return %c0_i32, %c0_i32_0 : i32, i32
  }
  func.func @transform_5(%arg0: i32) -> (i32, i32) {
    %c0_i32 = arith.constant 0 : i32
    %c0_i32_0 = arith.constant 0 : i32
    %c0_i32_1 = arith.constant 0 : i32
    return %c0_i32, %c0_i32_0 : i32, i32
  }
  func.func @transform_6(%arg0: i32) -> (i32, i32) {
    %c0_i32 = arith.constant 0 : i32
    %c0_i32_0 = arith.constant 0 : i32
    %c0_i32_1 = arith.constant 0 : i32
    return %c0_i32, %c0_i32_0 : i32, i32
  }
  func.func @transform_7(%arg0: i32) -> (i32, i32) {
    %c0_i32 = arith.constant 0 : i32
    %c0_i32_0 = arith.constant 0 : i32
    %c0_i32_1 = arith.constant 0 : i32
    return %c0_i32, %c0_i32_0 : i32, i32
  }
  func.func @transform_8(%arg0: i32) -> (i32, i32) {
    %c0_i32 = arith.constant 0 : i32
    %c0_i32_0 = arith.constant 0 : i32
    %c0_i32_1 = arith.constant 0 : i32
    return %c0_i32, %c0_i32_0 : i32, i32
  }
  func.func @transform_9(%arg0: i32) -> (i32, i32) {
    %c0_i32 = arith.constant 0 : i32
    %c0_i32_0 = arith.constant 0 : i32
    %c0_i32_1 = arith.constant 0 : i32
    return %c0_i32, %c0_i32_0 : i32, i32
  }
  func.func @transform_10(%arg0: i32) -> (i32, i32) {
    %c0_i32 = arith.constant 0 : i32
    %c0_i32_0 = arith.constant 0 : i32
    %c0_i32_1 = arith.constant 0 : i32
    return %c0_i32, %c0_i32_0 : i32, i32
  }
  func.func @transform_11(%arg0: i32) -> (i32, i32) {
    %c0_i32 = arith.constant 0 : i32
    %c0_i32_0 = arith.constant 0 : i32
    %c0_i32_1 = arith.constant 0 : i32
    return %c0_i32, %c0_i32_0 : i32, i32
  }
  func.func @transform_12(%arg0: i32) -> (i32, i32, i32) {
    %c0_i32 = arith.constant 0 : i32
    %c0_i32_0 = arith.constant 0 : i32
    %c0_i32_1 = arith.constant 0 : i32
    return %arg0, %c0_i32, %c0_i32_0 : i32, i32, i32
  }
}

</mosaic_0001>

<llo_original>
// kernel: tpu_custom_call.1
$region0: #{tpu_custom_call.1}
  #allocation0 [shape = 'u32[]', space=smem, size = 0x4, offset = 0x4, fixed_abs, tag = 'smem constant byte address 0x4 - core index']
  #allocation1 [shape = 'u32[144,128]{1,0:T(1,128)}', space=vmem, size = 0x12000, scoped, tag = 'internal scratch']
  %s0 = inlined_call_operand.hbm [shape: f32[2,8,32], index: 0, kind: input, shape index: {}]
  %s1 = inlined_call_operand.hbm [shape: f32[2,1,8], index: 1, kind: input, shape index: {}]
  %s2 = inlined_call_operand.vmem [shape: f32[1,32], index: 2, kind: input, shape index: {}]
  %s3 = inlined_call_operand.vmem [shape: f32[1,32], index: 3, kind: input, shape index: {}]
  %s4 = inlined_call_operand.vmem [shape: f32[32,96], index: 4, kind: input, shape index: {}]
  %s5 = inlined_call_operand.vmem [shape: f32[1,96], index: 5, kind: input, shape index: {}]
  %s6 = inlined_call_operand.vmem [shape: f32[32,32], index: 6, kind: input, shape index: {}]
  %s7 = inlined_call_operand.vmem [shape: f32[1,32], index: 7, kind: input, shape index: {}]
  %s8 = inlined_call_operand.vmem [shape: f32[32,64], index: 8, kind: input, shape index: {}]
  %s9 = inlined_call_operand.vmem [shape: f32[1,64], index: 9, kind: input, shape index: {}]
  %s10 = inlined_call_operand.vmem [shape: f32[64,32], index: 10, kind: input, shape index: {}]
  %s11 = inlined_call_operand.vmem [shape: f32[1,32], index: 11, kind: input, shape index: {}]
  %s12 = inlined_call_operand.hbm [shape: f32[2,8,32], index: 12, kind: output, shape index: {}]
  %s13 = sld [smem:[#allocation0]]
  $region66: #{tpu_custom_call.1} parent=0
    _
  %s15 = ssub.s32 1, %s13
  %s16 = scalar_select 0, %s15, %s13
  $region1: #{tpu_custom_call.1} parent=0
    #allocation2 [shape = 'u8[8192]{0}', space=vmem, size = 0x2000, scoped, tag = 'input window, operand 0, single buffered']
    #allocation3 [shape = 's32[1]{0}', space=sflag, size = 0x4, scoped, tag = 'scoped memory for tpu_custom_call.1']
    #allocation4 [shape = 's32[1]{0}', space=sflag, size = 0x4, scoped, tag = 'scoped memory for tpu_custom_call.1']
    #allocation5 [shape = 'u8[1024]{0}', space=vmem, size = 0x400, scoped, tag = 'input window, operand 1, single buffered']
    #allocation6 [shape = 's32[1]{0}', space=sflag, size = 0x4, scoped, tag = 'scoped memory for tpu_custom_call.1']
    #allocation7 [shape = 'u8[8192]{0}', space=vmem, size = 0x2000, scoped, tag = 'output window, operand 0, single buffered']
    %17 = vsyncpa [#allocation3], 0
    %18 = vsyncpa [#allocation6], 0
    %19 = vsyncpa [#allocation4], 0
    // Predicated region
    $region2: #{tpu_custom_call.1} parent=1 // pred_check
      _
    $region3: #{tpu_custom_call.1} parent=1 // pred_check_branch
      %21 = sbr.rel (0) target = $region5
    $region4: #{tpu_custom_call.1} parent=1 // pred_region
      %s23 = ssub.s32 256, 256
      %24 = vsyncadd [#allocation3], %s23
      %s25 = sshll.u32 [#allocation2], 4
      %s26 = int_to_ptr.vmem [resolvable:$true] %s25
      %31 = dma.hbm_to_vmem [thread:$0]  %s0, 256, %s26, [#allocation3], 128, 128, 8
    $region5: #{tpu_custom_call.1} parent=1 // pred_fallthru
      _
    // Predicated region
    $region6: #{tpu_custom_call.1} parent=1 // pred_check
      _
    $region7: #{tpu_custom_call.1} parent=1 // pred_check_branch
      %33 = sbr.rel (0) target = $region9
    $region8: #{tpu_custom_call.1} parent=1 // pred_region
      %s35 = ssub.s32 32, 32
      %36 = vsyncadd [#allocation6], %s35
      %s37 = sshll.u32 [#allocation5], 4
      %s38 = int_to_ptr.vmem [resolvable:$true] %s37
      %43 = dma.hbm_to_vmem [thread:$0]  %s1, 32, %s38, [#allocation6], 16, 16, 1
    $region9: #{tpu_custom_call.1} parent=1 // pred_fallthru
      _
    // Predicated region
    $region10: #{tpu_custom_call.1} parent=1 // pred_check
      _
    $region11: #{tpu_custom_call.1} parent=1 // pred_check_branch
      %45 = sbr.rel (0) target = $region13
    $region12: #{tpu_custom_call.1} parent=1 // pred_region
      _
    $region13: #{tpu_custom_call.1} parent=1 // pred_fallthru
      _
    // Predicated region
    $region14: #{tpu_custom_call.1} parent=1 // pred_check
      _
    $region15: #{tpu_custom_call.1} parent=1 // pred_check_branch
      %47 = sbr.rel (0) target = $region17
    $region16: #{tpu_custom_call.1} parent=1 // pred_region
      _
    $region17: #{tpu_custom_call.1} parent=1 // pred_fallthru
      _
    // Predicated region
    $region18: #{tpu_custom_call.1} parent=1 // pred_check
      _
    $region19: #{tpu_custom_call.1} parent=1 // pred_check_branch
      %49 = sbr.rel (0) target = $region21
    $region20: #{tpu_custom_call.1} parent=1 // pred_region
      _
    $region21: #{tpu_custom_call.1} parent=1 // pred_fallthru
      _
    // Predicated region
    $region22: #{tpu_custom_call.1} parent=1 // pred_check
      _
    $region23: #{tpu_custom_call.1} parent=1 // pred_check_branch
      %51 = sbr.rel (0) target = $region25
    $region24: #{tpu_custom_call.1} parent=1 // pred_region
      _
    $region25: #{tpu_custom_call.1} parent=1 // pred_fallthru
      _
    // Predicated region
    $region26: #{tpu_custom_call.1} parent=1 // pred_check
      _
    $region27: #{tpu_custom_call.1} parent=1 // pred_check_branch
      %53 = sbr.rel (0) target = $region29
    $region28: #{tpu_custom_call.1} parent=1 // pred_region
      _
    $region29: #{tpu_custom_call.1} parent=1 // pred_fallthru
      _
    // Predicated region
    $region30: #{tpu_custom_call.1} parent=1 // pred_check
      _
    $region31: #{tpu_custom_call.1} parent=1 // pred_check_branch
      %55 = sbr.rel (0) target = $region33
    $region32: #{tpu_custom_call.1} parent=1 // pred_region
      _
    $region33: #{tpu_custom_call.1} parent=1 // pred_fallthru
      _
    // Predicated region
    $region34: #{tpu_custom_call.1} parent=1 // pred_check
      _
    $region35: #{tpu_custom_call.1} parent=1 // pred_check_branch
      %57 = sbr.rel (0) target = $region37
    $region36: #{tpu_custom_call.1} parent=1 // pred_region
      _
    $region37: #{tpu_custom_call.1} parent=1 // pred_fallthru
      _
    // Predicated region
    $region38: #{tpu_custom_call.1} parent=1 // pred_check
      _
    $region39: #{tpu_custom_call.1} parent=1 // pred_check_branch
      %59 = sbr.rel (0) target = $region41
    $region40: #{tpu_custom_call.1} parent=1 // pred_region
      _
    $region41: #{tpu_custom_call.1} parent=1 // pred_fallthru
      _
    // Predicated region
    $region42: #{tpu_custom_call.1} parent=1 // pred_check
      _
    $region43: #{tpu_custom_call.1} parent=1 // pred_check_branch
      %61 = sbr.rel (0) target = $region45
    $region44: #{tpu_custom_call.1} parent=1 // pred_region
      _
    $region45: #{tpu_custom_call.1} parent=1 // pred_fallthru
      _
    // Predicated region
    $region46: #{tpu_custom_call.1} parent=1 // pred_check
      _
    $region47: #{tpu_custom_call.1} parent=1 // pred_check_branch
      %63 = sbr.rel (0) target = $region49
    $region48: #{tpu_custom_call.1} parent=1 // pred_region
      _
    $region49: #{tpu_custom_call.1} parent=1 // pred_fallthru
      _
    // Predicated region
    $region50: #{tpu_custom_call.1} parent=1 // pred_check
      _
    $region51: #{tpu_custom_call.1} parent=1 // pred_check_branch
      %65 = sbr.rel (0) target = $region53
    $region52: #{tpu_custom_call.1} parent=1 // pred_region
      %66 = dma.done [#allocation3], 256
    $region53: #{tpu_custom_call.1} parent=1 // pred_fallthru
      _
    // Predicated region
    $region54: #{tpu_custom_call.1} parent=1 // pred_check
      _
    $region55: #{tpu_custom_call.1} parent=1 // pred_check_branch
      %68 = sbr.rel (0) target = $region57
    $region56: #{tpu_custom_call.1} parent=1 // pred_region
      %69 = dma.done [#allocation6], 32
    $region57: #{tpu_custom_call.1} parent=1 // pred_fallthru
      _
    %v70 = vld [vmem:[#allocation2] sm:$0xff]
    %v71 = vld [vmem:[#allocation2 + $0x8] sm:$0xff]
    %v72 = vld [vmem:[%s2] sm:$0x1]
    %v73 = vld [vmem:[%s3] sm:$0x1]
    %v74 = vld [vmem:[#allocation5] sm:$0x1]
    %v75 = vld [vmem:[#allocation5 + $0x1] sm:$0x1]
    %vm76 = vcmp.gt.f32.partialorder %v74, 0.0
    %vm77 = vcmp.gt.f32.partialorder %v75, 0.0
    %v78 = vsel %vm76, 0.0, -1e+10
    %v79 = vsel %vm77, 0.0, -1e+10
    %vm80 = vcmask 261120
    %v81 = vsel %vm80, %v70, 0.0
    %82 = vadd.xlane.f32.xlu0 %v81
    %v83 = vpop.xlane.xlu0 %82
    %v84 = vsel %vm80, %v71, 0.0
    %85 = vadd.xlane.f32.xlu0 %v84
    %v86 = vpop.xlane.xlu0 %85
    %v87 = vrcp.pop 32.0
    %v88 = vmul.f32 %v83, %v87
    %v89 = vmul.f32 %v86, %v87
    %v90 = vsub.f32 %v70, %v88
    %v91 = vsub.f32 %v71, %v89
    %v92 = vmul.f32 %v90, %v90
    %v93 = vmul.f32 %v91, %v91
    %v94 = vsel %vm80, %v92, 0.0
    %95 = vadd.xlane.f32.xlu0 %v94
    %v96 = vpop.xlane.xlu0 %95
    %v97 = vsel %vm80, %v93, 0.0
    %98 = vadd.xlane.f32.xlu0 %v97
    %v99 = vpop.xlane.xlu0 %98
    %v100 = vmul.f32 %v96, %v87
    %v101 = vmul.f32 %v99, %v87
    %v102 = vadd.f32 %v100, 1e-06
    %v103 = vadd.f32 %v101, 1e-06
    %v104 = vrsqrt.pop %v102
    %v105 = vrsqrt.pop %v103
    %v106 = vmul.f32 %v90, %v104
    %v107 = vmul.f32 %v91, %v105
    %v109 = vlaneseq
    %v110 = vshrl.u32 %v109, 7
    %v111 = vsub.s32 0, %v110
    %v112 = vrot.slane %v72, %v111
    %v114 = vmul.f32 %v106, %v112
    %v115 = vmul.f32 %v107, %v112
    %v117 = vlaneseq
    %v118 = vshrl.u32 %v117, 7
    %v119 = vsub.s32 0, %v118
    %v120 = vrot.slane %v73, %v119
    %v122 = vadd.f32 %v114, %v120
    %v123 = vadd.f32 %v115, %v120
    %v124 = vld [vmem:[%s4] sm:$0xff]
    %v125 = vld [vmem:[%s4 + $0x8] sm:$0xff]
    %v126 = vld [vmem:[%s4 + $0x10] sm:$0xff]
    %v127 = vld [vmem:[%s4 + $0x18] sm:$0xff]
    %v128 = vld [vmem:[%s5] sm:$0x1]
    %v130 = vlaneseq
    %v131 = vshrl.u32 %v130, 7
    %v132 = vsub.s32 0, %v131
    %v133 = vrot.slane %v128, %v132
    %v136 = vsel %vm80, %v122, 0
    %v139 = vsel %vm80, %v123, 0
    %141 = vmatprep.subr.mxu0 0.0
    %142 = vmatpush1.msra.mxu0 0.0
    %143 = vmatprep.subr.mxu0 0.0
    %144 = vmatpush1.msra.mxu0 0.0
    %145 = vmatprep.subr.mxu0 0.0
    %146 = vmatpush1.msra.mxu0 0.0
    %147 = vmatprep.subr.mxu0 0.0
    %148 = vmatpush1.msra.mxu0 0.0
    %149 = vmatprep.subr.mxu0 0.0
    %150 = vmatpush1.msra.mxu0 0.0
    %151 = vmatprep.subr.mxu0 0.0
    %152 = vmatpush1.msra.mxu0 0.0
    %153 = vmatprep.subr.mxu0 0.0
    %154 = vmatpush1.msra.mxu0 0.0
    %155 = vmatprep.subr.mxu0 0.0
    %156 = vmatpush1.msra.mxu0 0.0
    %157 = vmatprep.subr.mxu0 0.0
    %158 = vmatpush1.msra.mxu0 0.0
    %159 = vmatprep.subr.mxu0 0.0
    %160 = vmatpush1.msra.mxu0 0.0
    %161 = vmatprep.subr.mxu0 0.0
    %162 = vmatpush1.msra.mxu0 0.0
    %163 = vmatprep.subr.mxu0 0.0
    %164 = vmatpush1.msra.mxu0 0.0
    %165 = vmatprep.subr.mxu0 0.0
    %166 = vmatpush1.msra.mxu0 %v127
    %167 = vmatprep.subr.mxu0 0.0
    %168 = vmatpush1.msra.mxu0 %v126
    %169 = vmatprep.subr.mxu0 0.0
    %170 = vmatpush1.msra.mxu0 %v125
    %171 = vmatprep.subr.mxu0 0.0
    %172 = vmatpush1.msra.mxu0 %v124
    %173 = vmatprep.subr.mxu0 0.0
    %174 = vmatpush2.msra.mxu0 0.0
    %175 = vmatprep.subr.mxu0 0.0
    %176 = vmatpush2.msra.mxu0 0.0
    %177 = vmatprep.subr.mxu0 0.0
    %178 = vmatpush2.msra.mxu0 0.0
    %179 = vmatprep.subr.mxu0 0.0
    %180 = vmatpush2.msra.mxu0 0.0
    %181 = vmatprep.subr.mxu0 0.0
    %182 = vmatpush2.msra.mxu0 0.0
    %183 = vmatprep.subr.mxu0 0.0
    %184 = vmatpush2.msra.mxu0 0.0
    %185 = vmatprep.subr.mxu0 0.0
    %186 = vmatpush2.msra.mxu0 0.0
    %187 = vmatprep.subr.mxu0 0.0
    %188 = vmatpush2.msra.mxu0 0.0
    %189 = vmatprep.subr.mxu0 0.0
    %190 = vmatpush2.msra.mxu0 0.0
    %191 = vmatprep.subr.mxu0 0.0
    %192 = vmatpush2.msra.mxu0 0.0
    %193 = vmatprep.subr.mxu0 0.0
    %194 = vmatpush2.msra.mxu0 0.0
    %195 = vmatprep.subr.mxu0 0.0
    %196 = vmatpush2.msra.mxu0 0.0
    %197 = vmatprep.subr.mxu0 0.0
    %198 = vmatpush2.msra.mxu0 0.0
    %199 = vmatprep.subr.mxu0 0.0
    %200 = vmatpush2.msra.mxu0 0.0
    %201 = vmatprep.subr.mxu0 0.0
    %202 = vmatpush2.msra.mxu0 0.0
    %203 = vmatprep.subr.mxu0 0.0
    %204 = vmatpush2.msra.mxu0 0.0
    %205 = vmatprep.mubr.f32.mxu0 0.0
    %206 = vmatmul.mubr.f32.gmra.mxu0 %v136
    %v207 = vpop.f32.mrf.mxu0
    %v208 = vadd.f32 %v133, %v207
    %v209 = vpop.f32.mrf.mxu0
    %210 = vmatprep.mubr.f32.mxu0 0.0
    %211 = vmatmul.mubr.f32.gmra.mxu0 %v139
    %v212 = vpop.f32.mrf.mxu0
    %v213 = vadd.f32 %v133, %v212
    %v214 = vpop.f32.mrf.mxu0
    %215 = vdwg.mxu0
    %v218 = vlaneseq
    %v219 = vshrl.u32 %v218, 7
    %v220 = vsub.s32 0, %v219
    %v221 = vrot.slane %v78, %v220
    %v222 = vlaneseq
    %v223 = vshrl.u32 %v222, 7
    %v224 = vsub.s32 0, %v223
    %v225 = vrot.slane %v79, %v224
    %229 = vrot.lane.b32.xlu0 %v208, 96
    %v230 = vpop.permute.xlu0 %229
    %vm231 = vcmask 64512
    %v232 = vsel %vm231, %v208, 0
    %v234 = vsel %vm231, %v230, 0
    %236 = vmatprep.subr.mxu0 0.0
    %237 = vmatpush1.xpose.msra.mxu0 0.0
    %238 = vmatprep.subr.mxu0 0.0
    %239 = vmatpush1.xpose.msra.mxu0 0.0
    %240 = vmatprep.subr.mxu0 0.0
    %241 = vmatpush1.xpose.msra.mxu0 0.0
    %242 = vmatprep.subr.mxu0 0.0
    %243 = vmatpush1.xpose.msra.mxu0 0.0
    %244 = vmatprep.subr.mxu0 0.0
    %245 = vmatpush1.xpose.msra.mxu0 0.0
    %246 = vmatprep.subr.mxu0 0.0
    %247 = vmatpush1.xpose.msra.mxu0 0.0
    %248 = vmatprep.subr.mxu0 0.0
    %249 = vmatpush1.xpose.msra.mxu0 0.0
    %250 = vmatprep.subr.mxu0 0.0
    %251 = vmatpush1.xpose.msra.mxu0 0.0
    %252 = vmatprep.subr.mxu0 0.0
    %253 = vmatpush1.xpose.msra.mxu0 0.0
    %254 = vmatprep.subr.mxu0 0.0
    %255 = vmatpush1.xpose.msra.mxu0 0.0
    %256 = vmatprep.subr.mxu0 0.0
    %257 = vmatpush1.xpose.msra.mxu0 0.0
    %258 = vmatprep.subr.mxu0 0.0
    %259 = vmatpush1.xpose.msra.mxu0 0.0
    %260 = vmatprep.subr.mxu0 0.0
    %261 = vmatpush1.xpose.msra.mxu0 0.0
    %262 = vmatprep.subr.mxu0 0.0
    %263 = vmatpush1.xpose.msra.mxu0 0.0
    %264 = vmatprep.subr.mxu0 0.0
    %265 = vmatpush1.xpose.msra.mxu0 0.0
    %266 = vmatprep.subr.mxu0 0.0
    %267 = vmatpush1.xpose.msra.mxu0 %v234
    %268 = vmatprep.subr.mxu0 0.0
    %269 = vmatpush2.xpose.msra.mxu0 0.0
    %270 = vmatprep.subr.mxu0 0.0
    %271 = vmatpush2.xpose.msra.mxu0 0.0
    %272 = vmatprep.subr.mxu0 0.0
    %273 = vmatpush2.xpose.msra.mxu0 0.0
    %274 = vmatprep.subr.mxu0 0.0
    %275 = vmatpush2.xpose.msra.mxu0 0.0
    %276 = vmatprep.subr.mxu0 0.0
    %277 = vmatpush2.xpose.msra.mxu0 0.0
    %278 = vmatprep.subr.mxu0 0.0
    %279 = vmatpush2.xpose.msra.mxu0 0.0
    %280 = vmatprep.subr.mxu0 0.0
    %281 = vmatpush2.xpose.msra.mxu0 0.0
    %282 = vmatprep.subr.mxu0 0.0
    %283 = vmatpush2.xpose.msra.mxu0 0.0
    %284 = vmatprep.subr.mxu0 0.0
    %285 = vmatpush2.xpose.msra.mxu0 0.0
    %286 = vmatprep.subr.mxu0 0.0
    %287 = vmatpush2.xpose.msra.mxu0 0.0
    %288 = vmatprep.subr.mxu0 0.0
    %289 = vmatpush2.xpose.msra.mxu0 0.0
    %290 = vmatprep.subr.mxu0 0.0
    %291 = vmatpush2.xpose.msra.mxu0 0.0
    %292 = vmatprep.subr.mxu0 0.0
    %293 = vmatpush2.xpose.msra.mxu0 0.0
    %294 = vmatprep.subr.mxu0 0.0
    %295 = vmatpush2.xpose.msra.mxu0 0.0
    %296 = vmatprep.subr.mxu0 0.0
    %297 = vmatpush2.xpose.msra.mxu0 0.0
    %298 = vmatprep.subr.mxu0 0.0
    %299 = vmatpush2.xpose.msra.mxu0 0.0
    %300 = vmatprep.mubr.f32.mxu0 0.0
    %301 = vmatmul.mubr.f32.gmra.mxu0 %v232
    %v302 = vpop.f32.mrf.mxu0
    %v303 = vadd.f32 %v221, %v302
    %v304 = vpop.f32.mrf.mxu0
    %305 = vdwg.mxu0
    %307 = vrot.lane.b32.xlu0 %v213, 96
    %v308 = vpop.permute.xlu0 %307
    %v309 = vsel %vm231, %v213, 0
    %v311 = vsel %vm231, %v308, 0
    %313 = vmatprep.subr.mxu0 0.0
    %314 = vmatpush1.xpose.msra.mxu0 0.0
    %315 = vmatprep.subr.mxu0 0.0
    %316 = vmatpush1.xpose.msra.mxu0 0.0
    %317 = vmatprep.subr.mxu0 0.0
    %318 = vmatpush1.xpose.msra.mxu0 0.0
    %319 = vmatprep.subr.mxu0 0.0
    %320 = vmatpush1.xpose.msra.mxu0 0.0
    %321 = vmatprep.subr.mxu0 0.0
    %322 = vmatpush1.xpose.msra.mxu0 0.0
    %323 = vmatprep.subr.mxu0 0.0
    %324 = vmatpush1.xpose.msra.mxu0 0.0
    %325 = vmatprep.subr.mxu0 0.0
    %326 = vmatpush1.xpose.msra.mxu0 0.0
    %327 = vmatprep.subr.mxu0 0.0
    %328 = vmatpush1.xpose.msra.mxu0 0.0
    %329 = vmatprep.subr.mxu0 0.0
    %330 = vmatpush1.xpose.msra.mxu0 0.0
    %331 = vmatprep.subr.mxu0 0.0
    %332 = vmatpush1.xpose.msra.mxu0 0.0
    %333 = vmatprep.subr.mxu0 0.0
    %334 = vmatpush1.xpose.msra.mxu0 0.0
    %335 = vmatprep.subr.mxu0 0.0
    %336 = vmatpush1.xpose.msra.mxu0 0.0
    %337 = vmatprep.subr.mxu0 0.0
    %338 = vmatpush1.xpose.msra.mxu0 0.0
    %339 = vmatprep.subr.mxu0 0.0
    %340 = vmatpush1.xpose.msra.mxu0 0.0
    %341 = vmatprep.subr.mxu0 0.0
    %342 = vmatpush1.xpose.msra.mxu0 0.0
    %343 = vmatprep.subr.mxu0 0.0
    %344 = vmatpush1.xpose.msra.mxu0 %v311
    %345 = vmatprep.subr.mxu0 0.0
    %346 = vmatpush2.xpose.msra.mxu0 0.0
    %347 = vmatprep.subr.mxu0 0.0
    %348 = vmatpush2.xpose.msra.mxu0 0.0
    %349 = vmatprep.subr.mxu0 0.0
    %350 = vmatpush2.xpose.msra.mxu0 0.0
    %351 = vmatprep.subr.mxu0 0.0
    %352 = vmatpush2.xpose.msra.mxu0 0.0
    %353 = vmatprep.subr.mxu0 0.0
    %354 = vmatpush2.xpose.msra.mxu0 0.0
    %355 = vmatprep.subr.mxu0 0.0
    %356 = vmatpush2.xpose.msra.mxu0 0.0
    %357 = vmatprep.subr.mxu0 0.0
    %358 = vmatpush2.xpose.msra.mxu0 0.0
    %359 = vmatprep.subr.mxu0 0.0
    %360 = vmatpush2.xpose.msra.mxu0 0.0
    %361 = vmatprep.subr.mxu0 0.0
    %362 = vmatpush2.xpose.msra.mxu0 0.0
    %363 = vmatprep.subr.mxu0 0.0
    %364 = vmatpush2.xpose.msra.mxu0 0.0
    %365 = vmatprep.subr.mxu0 0.0
    %366 = vmatpush2.xpose.msra.mxu0 0.0
    %367 = vmatprep.subr.mxu0 0.0
    %368 = vmatpush2.xpose.msra.mxu0 0.0
    %369 = vmatprep.subr.mxu0 0.0
    %370 = vmatpush2.xpose.msra.mxu0 0.0
    %371 = vmatprep.subr.mxu0 0.0
    %372 = vmatpush2.xpose.msra.mxu0 0.0
    %373 = vmatprep.subr.mxu0 0.0
    %374 = vmatpush2.xpose.msra.mxu0 0.0
    %375 = vmatprep.subr.mxu0 0.0
    %376 = vmatpush2.xpose.msra.mxu0 0.0
    %377 = vmatprep.mubr.f32.mxu0 0.0
    %378 = vmatmul.mubr.f32.gmra.mxu0 %v309
    %v379 = vpop.f32.mrf.mxu0
    %v380 = vadd.f32 %v225, %v379
    %v381 = vpop.f32.mrf.mxu0
    %382 = vdwg.mxu0
    %v383 = vsel %vm231, %v303, -inf
    %384 = vmax.xlane.f32.xlu0 %v383
    %v385 = vpop.xlane.xlu0 %384
    %v386 = vsel %vm231, %v380, -inf
    %387 = vmax.xlane.f32.xlu0 %v386
    %v388 = vpop.xlane.xlu0 %387
    %v389 = vsub.f32 %v303, %v385
    %v390 = vsub.f32 %v380, %v388
    %v391 = vmul.f32 %v389, 1.442695
    %v392 = vpow.pop %v391
    %v393 = vmul.f32 %v390, 1.442695
    %v394 = vpow.pop %v393
    %v395 = vsel %vm231, %v392, 0.0
    %396 = vadd.xlane.f32.xlu0 %v395
    %v397 = vpop.xlane.xlu0 %396
    %v398 = vsel %vm231, %v394, 0.0
    %399 = vadd.xlane.f32.xlu0 %v398
    %v400 = vpop.xlane.xlu0 %399
    %v401 = vrcp.pop %v397
    %v402 = vrcp.pop %v400
    %v403 = vmul.f32 %v392, %v401
    %v404 = vmul.f32 %v394, %v402
    %405 = vrot.lane.b32.xlu0 %v208, 64
    %v406 = vpop.permute.xlu0 %405
    %v409 = vsel %vm231, %v403, 0
    %411 = vmatprep.subr.mxu0 0.0
    %412 = vmatpush1.msra.mxu0 0.0
    %413 = vmatprep.subr.mxu0 0.0
    %414 = vmatpush1.msra.mxu0 0.0
    %415 = vmatprep.subr.mxu0 0.0
    %416 = vmatpush1.msra.mxu0 0.0
    %417 = vmatprep.subr.mxu0 0.0
    %418 = vmatpush1.msra.mxu0 0.0
    %419 = vmatprep.subr.mxu0 0.0
    %420 = vmatpush1.msra.mxu0 0.0
    %421 = vmatprep.subr.mxu0 0.0
    %422 = vmatpush1.msra.mxu0 0.0
    %423 = vmatprep.subr.mxu0 0.0
    %424 = vmatpush1.msra.mxu0 0.0
    %425 = vmatprep.subr.mxu0 0.0
    %426 = vmatpush1.msra.mxu0 0.0
    %427 = vmatprep.subr.mxu0 0.0
    %428 = vmatpush1.msra.mxu0 0.0
    %429 = vmatprep.subr.mxu0 0.0
    %430 = vmatpush1.msra.mxu0 0.0
    %431 = vmatprep.subr.mxu0 0.0
    %432 = vmatpush1.msra.mxu0 0.0
    %433 = vmatprep.subr.mxu0 0.0
    %434 = vmatpush1.msra.mxu0 0.0
    %435 = vmatprep.subr.mxu0 0.0
    %436 = vmatpush1.msra.mxu0 0.0
    %437 = vmatprep.subr.mxu0 0.0
    %438 = vmatpush1.msra.mxu0 0.0
    %439 = vmatprep.subr.mxu0 0.0
    %440 = vmatpush1.msra.mxu0 0.0
    %441 = vmatprep.subr.mxu0 0.0
    %442 = vmatpush1.msra.mxu0 %v406
    %443 = vmatprep.subr.mxu0 0.0
    %444 = vmatpush2.msra.mxu0 0.0
    %445 = vmatprep.subr.mxu0 0.0
    %446 = vmatpush2.msra.mxu0 0.0
    %447 = vmatprep.subr.mxu0 0.0
    %448 = vmatpush2.msra.mxu0 0.0
    %449 = vmatprep.subr.mxu0 0.0
    %450 = vmatpush2.msra.mxu0 0.0
    %451 = vmatprep.subr.mxu0 0.0
    %452 = vmatpush2.msra.mxu0 0.0
    %453 = vmatprep.subr.mxu0 0.0
    %454 = vmatpush2.msra.mxu0 0.0
    %455 = vmatprep.subr.mxu0 0.0
    %456 = vmatpush2.msra.mxu0 0.0
    %457 = vmatprep.subr.mxu0 0.0
    %458 = vmatpush2.msra.mxu0 0.0
    %459 = vmatprep.subr.mxu0 0.0
    %460 = vmatpush2.msra.mxu0 0.0
    %461 = vmatprep.subr.mxu0 0.0
    %462 = vmatpush2.msra.mxu0 0.0
    %463 = vmatprep.subr.mxu0 0.0
    %464 = vmatpush2.msra.mxu0 0.0
    %465 = vmatprep.subr.mxu0 0.0
    %466 = vmatpush2.msra.mxu0 0.0
    %467 = vmatprep.subr.mxu0 0.0
    %468 = vmatpush2.msra.mxu0 0.0
    %469 = vmatprep.subr.mxu0 0.0
    %470 = vmatpush2.msra.mxu0 0.0
    %471 = vmatprep.subr.mxu0 0.0
    %472 = vmatpush2.msra.mxu0 0.0
    %473 = vmatprep.subr.mxu0 0.0
    %474 = vmatpush2.msra.mxu0 0.0
    %475 = vmatprep.mubr.f32.mxu0 0.0
    %476 = vmatmul.mubr.f32.gmra.mxu0 %v409
    %v477 = vpop.f32.mrf.mxu0
    %v478 = vadd.f32 0.0, %v477
    %v479 = vpop.f32.mrf.mxu0
    %480 = vdwg.mxu0
    %481 = vrot.lane.b32.xlu0 %v213, 64
    %v482 = vpop.permute.xlu0 %481
    %v485 = vsel %vm231, %v404, 0
    %487 = vmatprep.subr.mxu0 0.0
    %488 = vmatpush1.msra.mxu0 0.0
    %489 = vmatprep.subr.mxu0 0.0
    %490 = vmatpush1.msra.mxu0 0.0
    %491 = vmatprep.subr.mxu0 0.0
    %492 = vmatpush1.msra.mxu0 0.0
    %493 = vmatprep.subr.mxu0 0.0
    %494 = vmatpush1.msra.mxu0 0.0
    %495 = vmatprep.subr.mxu0 0.0
    %496 = vmatpush1.msra.mxu0 0.0
    %497 = vmatprep.subr.mxu0 0.0
    %498 = vmatpush1.msra.mxu0 0.0
    %499 = vmatprep.subr.mxu0 0.0
    %500 = vmatpush1.msra.mxu0 0.0
    %501 = vmatprep.subr.mxu0 0.0
    %502 = vmatpush1.msra.mxu0 0.0
    %503 = vmatprep.subr.mxu0 0.0
    %504 = vmatpush1.msra.mxu0 0.0
    %505 = vmatprep.subr.mxu0 0.0
    %506 = vmatpush1.msra.mxu0 0.0
    %507 = vmatprep.subr.mxu0 0.0
    %508 = vmatpush1.msra.mxu0 0.0
    %509 = vmatprep.subr.mxu0 0.0
    %510 = vmatpush1.msra.mxu0 0.0
    %511 = vmatprep.subr.mxu0 0.0
    %512 = vmatpush1.msra.mxu0 0.0
    %513 = vmatprep.subr.mxu0 0.0
    %514 = vmatpush1.msra.mxu0 0.0
    %515 = vmatprep.subr.mxu0 0.0
    %516 = vmatpush1.msra.mxu0 0.0
    %517 = vmatprep.subr.mxu0 0.0
    %518 = vmatpush1.msra.mxu0 %v482
    %519 = vmatprep.subr.mxu0 0.0
    %520 = vmatpush2.msra.mxu0 0.0
    %521 = vmatprep.subr.mxu0 0.0
    %522 = vmatpush2.msra.mxu0 0.0
    %523 = vmatprep.subr.mxu0 0.0
    %524 = vmatpush2.msra.mxu0 0.0
    %525 = vmatprep.subr.mxu0 0.0
    %526 = vmatpush2.msra.mxu0 0.0
    %527 = vmatprep.subr.mxu0 0.0
    %528 = vmatpush2.msra.mxu0 0.0
    %529 = vmatprep.subr.mxu0 0.0
    %530 = vmatpush2.msra.mxu0 0.0
    %531 = vmatprep.subr.mxu0 0.0
    %532 = vmatpush2.msra.mxu0 0.0
    %533 = vmatprep.subr.mxu0 0.0
    %534 = vmatpush2.msra.mxu0 0.0
    %535 = vmatprep.subr.mxu0 0.0
    %536 = vmatpush2.msra.mxu0 0.0
    %537 = vmatprep.subr.mxu0 0.0
    %538 = vmatpush2.msra.mxu0 0.0
    %539 = vmatprep.subr.mxu0 0.0
    %540 = vmatpush2.msra.mxu0 0.0
    %541 = vmatprep.subr.mxu0 0.0
    %542 = vmatpush2.msra.mxu0 0.0
    %543 = vmatprep.subr.mxu0 0.0
    %544 = vmatpush2.msra.mxu0 0.0
    %545 = vmatprep.subr.mxu0 0.0
    %546 = vmatpush2.msra.mxu0 0.0
    %547 = vmatprep.subr.mxu0 0.0
    %548 = vmatpush2.msra.mxu0 0.0
    %549 = vmatprep.subr.mxu0 0.0
    %550 = vmatpush2.msra.mxu0 0.0
    %551 = vmatprep.mubr.f32.mxu0 0.0
    %552 = vmatmul.mubr.f32.gmra.mxu0 %v485
    %v553 = vpop.f32.mrf.mxu0
    %v554 = vadd.f32 0.0, %v553
    %v555 = vpop.f32.mrf.mxu0
    %556 = vdwg.mxu0
    %v557 = vld [vmem:[%s6] sm:$0xff]
    %558 = vrot.lane.b32.xlu0 %v208, 120
    %v559 = vpop.permute.xlu0 %558
    %560 = vrot.lane.b32.xlu0 %v208, 88
    %v561 = vpop.permute.xlu0 %560
    %v562 = vsel %vm231, %v559, 0
    %v564 = vsel %vm231, %v561, 0
    %566 = vmatprep.subr.mxu0 0.0
    %567 = vmatpush1.xpose.msra.mxu0 0.0
    %568 = vmatprep.subr.mxu0 0.0
    %569 = vmatpush1.xpose.msra.mxu0 0.0
    %570 = vmatprep.subr.mxu0 0.0
    %571 = vmatpush1.xpose.msra.mxu0 0.0
    %572 = vmatprep.subr.mxu0 0.0
    %573 = vmatpush1.xpose.msra.mxu0 0.0
    %574 = vmatprep.subr.mxu0 0.0
    %575 = vmatpush1.xpose.msra.mxu0 0.0
    %576 = vmatprep.subr.mxu0 0.0
    %577 = vmatpush1.xpose.msra.mxu0 0.0
    %578 = vmatprep.subr.mxu0 0.0
    %579 = vmatpush1.xpose.msra.mxu0 0.0
    %580 = vmatprep.subr.mxu0 0.0
    %581 = vmatpush1.xpose.msra.mxu0 0.0
    %582 = vmatprep.subr.mxu0 0.0
    %583 = vmatpush1.xpose.msra.mxu0 0.0
    %584 = vmatprep.subr.mxu0 0.0
    %585 = vmatpush1.xpose.msra.mxu0 0.0
    %586 = vmatprep.subr.mxu0 0.0
    %587 = vmatpush1.xpose.msra.mxu0 0.0
    %588 = vmatprep.subr.mxu0 0.0
    %589 = vmatpush1.xpose.msra.mxu0 0.0
    %590 = vmatprep.subr.mxu0 0.0
    %591 = vmatpush1.xpose.msra.mxu0 0.0
    %592 = vmatprep.subr.mxu0 0.0
    %593 = vmatpush1.xpose.msra.mxu0 0.0
    %594 = vmatprep.subr.mxu0 0.0
    %595 = vmatpush1.xpose.msra.mxu0 0.0
    %596 = vmatprep.subr.mxu0 0.0
    %597 = vmatpush1.xpose.msra.mxu0 %v564
    %598 = vmatprep.subr.mxu0 0.0
    %599 = vmatpush2.xpose.msra.mxu0 0.0
    %600 = vmatprep.subr.mxu0 0.0
    %601 = vmatpush2.xpose.msra.mxu0 0.0
    %602 = vmatprep.subr.mxu0 0.0
    %603 = vmatpush2.xpose.msra.mxu0 0.0
    %604 = vmatprep.subr.mxu0 0.0
    %605 = vmatpush2.xpose.msra.mxu0 0.0
    %606 = vmatprep.subr.mxu0 0.0
    %607 = vmatpush2.xpose.msra.mxu0 0.0
    %608 = vmatprep.subr.mxu0 0.0
    %609 = vmatpush2.xpose.msra.mxu0 0.0
    %610 = vmatprep.subr.mxu0 0.0
    %611 = vmatpush2.xpose.msra.mxu0 0.0
    %612 = vmatprep.subr.mxu0 0.0
    %613 = vmatpush2.xpose.msra.mxu0 0.0
    %614 = vmatprep.subr.mxu0 0.0
    %615 = vmatpush2.xpose.msra.mxu0 0.0
    %616 = vmatprep.subr.mxu0 0.0
    %617 = vmatpush2.xpose.msra.mxu0 0.0
    %618 = vmatprep.subr.mxu0 0.0
    %619 = vmatpush2.xpose.msra.mxu0 0.0
    %620 = vmatprep.subr.mxu0 0.0
    %621 = vmatpush2.xpose.msra.mxu0 0.0
    %622 = vmatprep.subr.mxu0 0.0
    %623 = vmatpush2.xpose.msra.mxu0 0.0
    %624 = vmatprep.subr.mxu0 0.0
    %625 = vmatpush2.xpose.msra.mxu0 0.0
    %626 = vmatprep.subr.mxu0 0.0
    %627 = vmatpush2.xpose.msra.mxu0 0.0
    %628 = vmatprep.subr.mxu0 0.0
    %629 = vmatpush2.xpose.msra.mxu0 0.0
    %630 = vmatprep.mubr.f32.mxu0 0.0
    %631 = vmatmul.mubr.f32.gmra.mxu0 %v562
    %v632 = vpop.f32.mrf.mxu0
    %v633 = vadd.f32 %v221, %v632
    %v634 = vpop.f32.mrf.mxu0
    %635 = vdwg.mxu0
    %636 = vrot.lane.b32.xlu0 %v213, 120
    %v637 = vpop.permute.xlu0 %636
    %638 = vrot.lane.b32.xlu0 %v213, 88
    %v639 = vpop.permute.xlu0 %638
    %v640 = vsel %vm231, %v637, 0
    %v642 = vsel %vm231, %v639, 0
    %644 = vmatprep.subr.mxu0 0.0
    %645 = vmatpush1.xpose.msra.mxu0 0.0
    %646 = vmatprep.subr.mxu0 0.0
    %647 = vmatpush1.xpose.msra.mxu0 0.0
    %648 = vmatprep.subr.mxu0 0.0
    %649 = vmatpush1.xpose.msra.mxu0 0.0
    %650 = vmatprep.subr.mxu0 0.0
    %651 = vmatpush1.xpose.msra.mxu0 0.0
    %652 = vmatprep.subr.mxu0 0.0
    %653 = vmatpush1.xpose.msra.mxu0 0.0
    %654 = vmatprep.subr.mxu0 0.0
    %655 = vmatpush1.xpose.msra.mxu0 0.0
    %656 = vmatprep.subr.mxu0 0.0
    %657 = vmatpush1.xpose.msra.mxu0 0.0
    %658 = vmatprep.subr.mxu0 0.0
    %659 = vmatpush1.xpose.msra.mxu0 0.0
    %660 = vmatprep.subr.mxu0 0.0
    %661 = vmatpush1.xpose.msra.mxu0 0.0
    %662 = vmatprep.subr.mxu0 0.0
    %663 = vmatpush1.xpose.msra.mxu0 0.0
    %664 = vmatprep.subr.mxu0 0.0
    %665 = vmatpush1.xpose.msra.mxu0 0.0
    %666 = vmatprep.subr.mxu0 0.0
    %667 = vmatpush1.xpose.msra.mxu0 0.0
    %668 = vmatprep.subr.mxu0 0.0
    %669 = vmatpush1.xpose.msra.mxu0 0.0
    %670 = vmatprep.subr.mxu0 0.0
    %671 = vmatpush1.xpose.msra.mxu0 0.0
    %672 = vmatprep.subr.mxu0 0.0
    %673 = vmatpush1.xpose.msra.mxu0 0.0
    %674 = vmatprep.subr.mxu0 0.0
    %675 = vmatpush1.xpose.msra.mxu0 %v642
    %676 = vmatprep.subr.mxu0 0.0
    %677 = vmatpush2.xpose.msra.mxu0 0.0
    %678 = vmatprep.subr.mxu0 0.0
    %679 = vmatpush2.xpose.msra.mxu0 0.0
    %680 = vmatprep.subr.mxu0 0.0
    %681 = vmatpush2.xpose.msra.mxu0 0.0
    %682 = vmatprep.subr.mxu0 0.0
    %683 = vmatpush2.xpose.msra.mxu0 0.0
    %684 = vmatprep.subr.mxu0 0.0
    %685 = vmatpush2.xpose.msra.mxu0 0.0
    %686 = vmatprep.subr.mxu0 0.0
    %687 = vmatpush2.xpose.msra.mxu0 0.0
    %688 = vmatprep.subr.mxu0 0.0
    %689 = vmatpush2.xpose.msra.mxu0 0.0
    %690 = vmatprep.subr.mxu0 0.0
    %691 = vmatpush2.xpose.msra.mxu0 0.0
    %692 = vmatprep.subr.mxu0 0.0
    %693 = vmatpush2.xpose.msra.mxu0 0.0
    %694 = vmatprep.subr.mxu0 0.0
    %695 = vmatpush2.xpose.msra.mxu0 0.0
    %696 = vmatprep.subr.mxu0 0.0
    %697 = vmatpush2.xpose.msra.mxu0 0.0
    %698 = vmatprep.subr.mxu0 0.0
    %699 = vmatpush2.xpose.msra.mxu0 0.0
    %700 = vmatprep.subr.mxu0 0.0
    %701 = vmatpush2.xpose.msra.mxu0 0.0
    %702 = vmatprep.subr.mxu0 0.0
    %703 = vmatpush2.xpose.msra.mxu0 0.0
    %704 = vmatprep.subr.mxu0 0.0
    %705 = vmatpush2.xpose.msra.mxu0 0.0
    %706 = vmatprep.subr.mxu0 0.0
    %707 = vmatpush2.xpose.msra.mxu0 0.0
    %708 = vmatprep.mubr.f32.mxu0 0.0
    %709 = vmatmul.mubr.f32.gmra.mxu0 %v640
    %v710 = vpop.f32.mrf.mxu0
    %v711 = vadd.f32 %v225, %v710
    %v712 = vpop.f32.mrf.mxu0
    %713 = vdwg.mxu0
    %v714 = vsel %vm231, %v633, -inf
    %715 = vmax.xlane.f32.xlu0 %v714
    %v716 = vpop.xlane.xlu0 %715
    %v717 = vsel %vm231, %v711, -inf
    %718 = vmax.xlane.f32.xlu0 %v717
    %v719 = vpop.xlane.xlu0 %718
    %v720 = vsub.f32 %v633, %v716
    %v721 = vsub.f32 %v711, %v719
    %v722 = vmul.f32 %v720, 1.442695
    %v723 = vpow.pop %v722
    %v724 = vmul.f32 %v721, 1.442695
    %v725 = vpow.pop %v724
    %v726 = vsel %vm231, %v723, 0.0
    %727 = vadd.xlane.f32.xlu0 %v726
    %v728 = vpop.xlane.xlu0 %727
    %v729 = vsel %vm231, %v725, 0.0
    %730 = vadd.xlane.f32.xlu0 %v729
    %v731 = vpop.xlane.xlu0 %730
    %v732 = vrcp.pop %v728
    %v733 = vrcp.pop %v731
    %v734 = vmul.f32 %v723, %v732
    %v735 = vmul.f32 %v725, %v733
    %736 = vrot.lane.b32.xlu0 %v208, 56
    %v737 = vpop.permute.xlu0 %736
    %v740 = vsel %vm231, %v734, 0
    %742 = vmatprep.subr.mxu0 0.0
    %743 = vmatpush1.msra.mxu0 0.0
    %744 = vmatprep.subr.mxu0 0.0
    %745 = vmatpush1.msra.mxu0 0.0
    %746 = vmatprep.subr.mxu0 0.0
    %747 = vmatpush1.msra.mxu0 0.0
    %748 = vmatprep.subr.mxu0 0.0
    %749 = vmatpush1.msra.mxu0 0.0
    %750 = vmatprep.subr.mxu0 0.0
    %751 = vmatpush1.msra.mxu0 0.0
    %752 = vmatprep.subr.mxu0 0.0
    %753 = vmatpush1.msra.mxu0 0.0
    %754 = vmatprep.subr.mxu0 0.0
    %755 = vmatpush1.msra.mxu0 0.0
    %756 = vmatprep.subr.mxu0 0.0
    %757 = vmatpush1.msra.mxu0 0.0
    %758 = vmatprep.subr.mxu0 0.0
    %759 = vmatpush1.msra.mxu0 0.0
    %760 = vmatprep.subr.mxu0 0.0
    %761 = vmatpush1.msra.mxu0 0.0
    %762 = vmatprep.subr.mxu0 0.0
    %763 = vmatpush1.msra.mxu0 0.0
    %764 = vmatprep.subr.mxu0 0.0
    %765 = vmatpush1.msra.mxu0 0.0
    %766 = vmatprep.subr.mxu0 0.0
    %767 = vmatpush1.msra.mxu0 0.0
    %768 = vmatprep.subr.mxu0 0.0
    %769 = vmatpush1.msra.mxu0 0.0
    %770 = vmatprep.subr.mxu0 0.0
    %771 = vmatpush1.msra.mxu0 0.0
    %772 = vmatprep.subr.mxu0 0.0
    %773 = vmatpush1.msra.mxu0 %v737
    %774 = vmatprep.subr.mxu0 0.0
    %775 = vmatpush2.msra.mxu0 0.0
    %776 = vmatprep.subr.mxu0 0.0
    %777 = vmatpush2.msra.mxu0 0.0
    %778 = vmatprep.subr.mxu0 0.0
    %779 = vmatpush2.msra.mxu0 0.0
    %780 = vmatprep.subr.mxu0 0.0
    %781 = vmatpush2.msra.mxu0 0.0
    %782 = vmatprep.subr.mxu0 0.0
    %783 = vmatpush2.msra.mxu0 0.0
    %784 = vmatprep.subr.mxu0 0.0
    %785 = vmatpush2.msra.mxu0 0.0
    %786 = vmatprep.subr.mxu0 0.0
    %787 = vmatpush2.msra.mxu0 0.0
    %788 = vmatprep.subr.mxu0 0.0
    %789 = vmatpush2.msra.mxu0 0.0
    %790 = vmatprep.subr.mxu0 0.0
    %791 = vmatpush2.msra.mxu0 0.0
    %792 = vmatprep.subr.mxu0 0.0
    %793 = vmatpush2.msra.mxu0 0.0
    %794 = vmatprep.subr.mxu0 0.0
    %795 = vmatpush2.msra.mxu0 0.0
    %796 = vmatprep.subr.mxu0 0.0
    %797 = vmatpush2.msra.mxu0 0.0
    %798 = vmatprep.subr.mxu0 0.0
    %799 = vmatpush2.msra.mxu0 0.0
    %800 = vmatprep.subr.mxu0 0.0
    %801 = vmatpush2.msra.mxu0 0.0
    %802 = vmatprep.subr.mxu0 0.0
    %803 = vmatpush2.msra.mxu0 0.0
    %804 = vmatprep.subr.mxu0 0.0
    %805 = vmatpush2.msra.mxu0 0.0
    %806 = vmatprep.mubr.f32.mxu0 0.0
    %807 = vmatmul.mubr.f32.gmra.mxu0 %v740
    %v808 = vpop.f32.mrf.mxu0
    %v809 = vadd.f32 0.0, %v808
    %v810 = vpop.f32.mrf.mxu0
    %811 = vdwg.mxu0
    %812 = vrot.lane.b32.xlu0 %v213, 56
    %v813 = vpop.permute.xlu0 %812
    %v816 = vsel %vm231, %v735, 0
    %818 = vmatprep.subr.mxu0 0.0
    %819 = vmatpush1.msra.mxu0 0.0
    %820 = vmatprep.subr.mxu0 0.0
    %821 = vmatpush1.msra.mxu0 0.0
    %822 = vmatprep.subr.mxu0 0.0
    %823 = vmatpush1.msra.mxu0 0.0
    %824 = vmatprep.subr.mxu0 0.0
    %825 = vmatpush1.msra.mxu0 0.0
    %826 = vmatprep.subr.mxu0 0.0
    %827 = vmatpush1.msra.mxu0 0.0
    %828 = vmatprep.subr.mxu0 0.0
    %829 = vmatpush1.msra.mxu0 0.0
    %830 = vmatprep.subr.mxu0 0.0
    %831 = vmatpush1.msra.mxu0 0.0
    %832 = vmatprep.subr.mxu0 0.0
    %833 = vmatpush1.msra.mxu0 0.0
    %834 = vmatprep.subr.mxu0 0.0
    %835 = vmatpush1.msra.mxu0 0.0
    %836 = vmatprep.subr.mxu0 0.0
    %837 = vmatpush1.msra.mxu0 0.0
    %838 = vmatprep.subr.mxu0 0.0
    %839 = vmatpush1.msra.mxu0 0.0
    %840 = vmatprep.subr.mxu0 0.0
    %841 = vmatpush1.msra.mxu0 0.0
    %842 = vmatprep.subr.mxu0 0.0
    %843 = vmatpush1.msra.mxu0 0.0
    %844 = vmatprep.subr.mxu0 0.0
    %845 = vmatpush1.msra.mxu0 0.0
    %846 = vmatprep.subr.mxu0 0.0
    %847 = vmatpush1.msra.mxu0 0.0
    %848 = vmatprep.subr.mxu0 0.0
    %849 = vmatpush1.msra.mxu0 %v813
    %850 = vmatprep.subr.mxu0 0.0
    %851 = vmatpush2.msra.mxu0 0.0
    %852 = vmatprep.subr.mxu0 0.0
    %853 = vmatpush2.msra.mxu0 0.0
    %854 = vmatprep.subr.mxu0 0.0
    %855 = vmatpush2.msra.mxu0 0.0
    %856 = vmatprep.subr.mxu0 0.0
    %857 = vmatpush2.msra.mxu0 0.0
    %858 = vmatprep.subr.mxu0 0.0
    %859 = vmatpush2.msra.mxu0 0.0
    %860 = vmatprep.subr.mxu0 0.0
    %861 = vmatpush2.msra.mxu0 0.0
    %862 = vmatprep.subr.mxu0 0.0
    %863 = vmatpush2.msra.mxu0 0.0
    %864 = vmatprep.subr.mxu0 0.0
    %865 = vmatpush2.msra.mxu0 0.0
    %866 = vmatprep.subr.mxu0 0.0
    %867 = vmatpush2.msra.mxu0 0.0
    %868 = vmatprep.subr.mxu0 0.0
    %869 = vmatpush2.msra.mxu0 0.0
    %870 = vmatprep.subr.mxu0 0.0
    %871 = vmatpush2.msra.mxu0 0.0
    %872 = vmatprep.subr.mxu0 0.0
    %873 = vmatpush2.msra.mxu0 0.0
    %874 = vmatprep.subr.mxu0 0.0
    %875 = vmatpush2.msra.mxu0 0.0
    %876 = vmatprep.subr.mxu0 0.0
    %877 = vmatpush2.msra.mxu0 0.0
    %878 = vmatprep.subr.mxu0 0.0
    %879 = vmatpush2.msra.mxu0 0.0
    %880 = vmatprep.subr.mxu0 0.0
    %881 = vmatpush2.msra.mxu0 0.0
    %882 = vmatprep.mubr.f32.mxu0 0.0
    %883 = vmatmul.mubr.f32.gmra.mxu0 %v816
    %v884 = vpop.f32.mrf.mxu0
    %v885 = vadd.f32 0.0, %v884
    %v886 = vpop.f32.mrf.mxu0
    %887 = vdwg.mxu0
    %v888 = vld [vmem:[%s6 + $0x8] sm:$0xff]
    %v890 = vsel %vm231, %v809, 0
    %v893 = vsel %vm231, %v885, 0
    %895 = vmatprep.subr.mxu0 0.0
    %896 = vmatpush1.msra.mxu0 0.0
    %897 = vmatprep.subr.mxu0 0.0
    %898 = vmatpush1.msra.mxu0 0.0
    %899 = vmatprep.subr.mxu0 0.0
    %900 = vmatpush1.msra.mxu0 0.0
    %901 = vmatprep.subr.mxu0 0.0
    %902 = vmatpush1.msra.mxu0 0.0
    %903 = vmatprep.subr.mxu0 0.0
    %904 = vmatpush1.msra.mxu0 0.0
    %905 = vmatprep.subr.mxu0 0.0
    %906 = vmatpush1.msra.mxu0 0.0
    %907 = vmatprep.subr.mxu0 0.0
    %908 = vmatpush1.msra.mxu0 0.0
    %909 = vmatprep.subr.mxu0 0.0
    %910 = vmatpush1.msra.mxu0 0.0
    %911 = vmatprep.subr.mxu0 0.0
    %912 = vmatpush1.msra.mxu0 0.0
    %913 = vmatprep.subr.mxu0 0.0
    %914 = vmatpush1.msra.mxu0 0.0
    %915 = vmatprep.subr.mxu0 0.0
    %916 = vmatpush1.msra.mxu0 0.0
    %917 = vmatprep.subr.mxu0 0.0
    %918 = vmatpush1.msra.mxu0 0.0
    %919 = vmatprep.subr.mxu0 0.0
    %920 = vmatpush1.msra.mxu0 0.0
    %921 = vmatprep.subr.mxu0 0.0
    %922 = vmatpush1.msra.mxu0 0.0
    %923 = vmatprep.subr.mxu0 0.0
    %924 = vmatpush1.msra.mxu0 0.0
    %925 = vmatprep.subr.mxu0 0.0
    %926 = vmatpush1.msra.mxu0 %v888
    %927 = vmatprep.subr.mxu0 0.0
    %928 = vmatpush2.msra.mxu0 0.0
    %929 = vmatprep.subr.mxu0 0.0
    %930 = vmatpush2.msra.mxu0 0.0
    %931 = vmatprep.subr.mxu0 0.0
    %932 = vmatpush2.msra.mxu0 0.0
    %933 = vmatprep.subr.mxu0 0.0
    %934 = vmatpush2.msra.mxu0 0.0
    %935 = vmatprep.subr.mxu0 0.0
    %936 = vmatpush2.msra.mxu0 0.0
    %937 = vmatprep.subr.mxu0 0.0
    %938 = vmatpush2.msra.mxu0 0.0
    %939 = vmatprep.subr.mxu0 0.0
    %940 = vmatpush2.msra.mxu0 0.0
    %941 = vmatprep.subr.mxu0 0.0
    %942 = vmatpush2.msra.mxu0 0.0
    %943 = vmatprep.subr.mxu0 0.0
    %944 = vmatpush2.msra.mxu0 0.0
    %945 = vmatprep.subr.mxu0 0.0
    %946 = vmatpush2.msra.mxu0 0.0
    %947 = vmatprep.subr.mxu0 0.0
    %948 = vmatpush2.msra.mxu0 0.0
    %949 = vmatprep.subr.mxu0 0.0
    %950 = vmatpush2.msra.mxu0 0.0
    %951 = vmatprep.subr.mxu0 0.0
    %952 = vmatpush2.msra.mxu0 0.0
    %953 = vmatprep.subr.mxu0 0.0
    %954 = vmatpush2.msra.mxu0 0.0
    %955 = vmatprep.subr.mxu0 0.0
    %956 = vmatpush2.msra.mxu0 0.0
    %957 = vmatprep.subr.mxu0 0.0
    %958 = vmatpush2.msra.mxu0 0.0
    %959 = vmatprep.mubr.f32.mxu0 0.0
    %960 = vmatmul.mubr.f32.gmra.mxu0 %v890
    %v961 = vpop.f32.mrf.mxu0
    %v962 = vadd.f32 0.0, %v961
    %v963 = vpop.f32.mrf.mxu0
    %964 = vmatprep.mubr.f32.mxu0 0.0
    %965 = vmatmul.mubr.f32.gmra.mxu0 %v893
    %v966 = vpop.f32.mrf.mxu0
    %v967 = vadd.f32 0.0, %v966
    %v968 = vpop.f32.mrf.mxu0
    %969 = vdwg.mxu0
    %v971 = vsel %vm231, %v478, 0
    %v974 = vsel %vm231, %v554, 0
    %976 = vmatprep.subr.mxu0 0.0
    %977 = vmatpush1.msra.mxu0 0.0
    %978 = vmatprep.subr.mxu0 0.0
    %979 = vmatpush1.msra.mxu0 0.0
    %980 = vmatprep.subr.mxu0 0.0
    %981 = vmatpush1.msra.mxu0 0.0
    %982 = vmatprep.subr.mxu0 0.0
    %983 = vmatpush1.msra.mxu0 0.0
    %984 = vmatprep.subr.mxu0 0.0
    %985 = vmatpush1.msra.mxu0 0.0
    %986 = vmatprep.subr.mxu0 0.0
    %987 = vmatpush1.msra.mxu0 0.0
    %988 = vmatprep.subr.mxu0 0.0
    %989 = vmatpush1.msra.mxu0 0.0
    %990 = vmatprep.subr.mxu0 0.0
    %991 = vmatpush1.msra.mxu0 0.0
    %992 = vmatprep.subr.mxu0 0.0
    %993 = vmatpush1.msra.mxu0 0.0
    %994 = vmatprep.subr.mxu0 0.0
    %995 = vmatpush1.msra.mxu0 0.0
    %996 = vmatprep.subr.mxu0 0.0
    %997 = vmatpush1.msra.mxu0 0.0
    %998 = vmatprep.subr.mxu0 0.0
    %999 = vmatpush1.msra.mxu0 0.0
    %1000 = vmatprep.subr.mxu0 0.0
    %1001 = vmatpush1.msra.mxu0 0.0
    %1002 = vmatprep.subr.mxu0 0.0
    %1003 = vmatpush1.msra.mxu0 0.0
    %1004 = vmatprep.subr.mxu0 0.0
    %1005 = vmatpush1.msra.mxu0 0.0
    %1006 = vmatprep.subr.mxu0 0.0
    %1007 = vmatpush1.msra.mxu0 %v557
    %1008 = vmatprep.subr.mxu0 0.0
    %1009 = vmatpush2.msra.mxu0 0.0
    %1010 = vmatprep.subr.mxu0 0.0
    %1011 = vmatpush2.msra.mxu0 0.0
    %1012 = vmatprep.subr.mxu0 0.0
    %1013 = vmatpush2.msra.mxu0 0.0
    %1014 = vmatprep.subr.mxu0 0.0
    %1015 = vmatpush2.msra.mxu0 0.0
    %1016 = vmatprep.subr.mxu0 0.0
    %1017 = vmatpush2.msra.mxu0 0.0
    %1018 = vmatprep.subr.mxu0 0.0
    %1019 = vmatpush2.msra.mxu0 0.0
    %1020 = vmatprep.subr.mxu0 0.0
    %1021 = vmatpush2.msra.mxu0 0.0
    %1022 = vmatprep.subr.mxu0 0.0
    %1023 = vmatpush2.msra.mxu0 0.0
    %1024 = vmatprep.subr.mxu0 0.0
    %1025 = vmatpush2.msra.mxu0 0.0
    %1026 = vmatprep.subr.mxu0 0.0
    %1027 = vmatpush2.msra.mxu0 0.0
    %1028 = vmatprep.subr.mxu0 0.0
    %1029 = vmatpush2.msra.mxu0 0.0
    %1030 = vmatprep.subr.mxu0 0.0
    %1031 = vmatpush2.msra.mxu0 0.0
    %1032 = vmatprep.subr.mxu0 0.0
    %1033 = vmatpush2.msra.mxu0 0.0
    %1034 = vmatprep.subr.mxu0 0.0
    %1035 = vmatpush2.msra.mxu0 0.0
    %1036 = vmatprep.subr.mxu0 0.0
    %1037 = vmatpush2.msra.mxu0 0.0
    %1038 = vmatprep.subr.mxu0 0.0
    %1039 = vmatpush2.msra.mxu0 0.0
    %1040 = vmatprep.mubr.f32.mxu0 0.0
    %1041 = vmatmul.mubr.f32.gmra.mxu0 %v971
    %v1042 = vpop.f32.mrf.mxu0
    %v1043 = vadd.f32 %v962, %v1042
    %v1044 = vpop.f32.mrf.mxu0
    %1045 = vmatprep.mubr.f32.mxu0 0.0
    %1046 = vmatmul.mubr.f32.gmra.mxu0 %v974
    %v1047 = vpop.f32.mrf.mxu0
    %v1048 = vadd.f32 %v967, %v1047
    %v1049 = vpop.f32.mrf.mxu0
    %1050 = vdwg.mxu0
    %1051 = vrot.lane.b32.xlu0 %v208, 112
    %v1052 = vpop.permute.xlu0 %1051
    %1053 = vrot.lane.b32.xlu0 %v208, 80
    %v1054 = vpop.permute.xlu0 %1053
    %v1055 = vsel %vm231, %v1052, 0
    %v1057 = vsel %vm231, %v1054, 0
    %1059 = vmatprep.subr.mxu0 0.0
    %1060 = vmatpush1.xpose.msra.mxu0 0.0
    %1061 = vmatprep.subr.mxu0 0.0
    %1062 = vmatpush1.xpose.msra.mxu0 0.0
    %1063 = vmatprep.subr.mxu0 0.0
    %1064 = vmatpush1.xpose.msra.mxu0 0.0
    %1065 = vmatprep.subr.mxu0 0.0
    %1066 = vmatpush1.xpose.msra.mxu0 0.0
    %1067 = vmatprep.subr.mxu0 0.0
    %1068 = vmatpush1.xpose.msra.mxu0 0.0
    %1069 = vmatprep.subr.mxu0 0.0
    %1070 = vmatpush1.xpose.msra.mxu0 0.0
    %1071 = vmatprep.subr.mxu0 0.0
    %1072 = vmatpush1.xpose.msra.mxu0 0.0
    %1073 = vmatprep.subr.mxu0 0.0
    %1074 = vmatpush1.xpose.msra.mxu0 0.0
    %1075 = vmatprep.subr.mxu0 0.0
    %1076 = vmatpush1.xpose.msra.mxu0 0.0
    %1077 = vmatprep.subr.mxu0 0.0
    %1078 = vmatpush1.xpose.msra.mxu0 0.0
    %1079 = vmatprep.subr.mxu0 0.0
    %1080 = vmatpush1.xpose.msra.mxu0 0.0
    %1081 = vmatprep.subr.mxu0 0.0
    %1082 = vmatpush1.xpose.msra.mxu0 0.0
    %1083 = vmatprep.subr.mxu0 0.0
    %1084 = vmatpush1.xpose.msra.mxu0 0.0
    %1085 = vmatprep.subr.mxu0 0.0
    %1086 = vmatpush1.xpose.msra.mxu0 0.0
    %1087 = vmatprep.subr.mxu0 0.0
    %1088 = vmatpush1.xpose.msra.mxu0 0.0
    %1089 = vmatprep.subr.mxu0 0.0
    %1090 = vmatpush1.xpose.msra.mxu0 %v1057
    %1091 = vmatprep.subr.mxu0 0.0
    %1092 = vmatpush2.xpose.msra.mxu0 0.0
    %1093 = vmatprep.subr.mxu0 0.0
    %1094 = vmatpush2.xpose.msra.mxu0 0.0
    %1095 = vmatprep.subr.mxu0 0.0
    %1096 = vmatpush2.xpose.msra.mxu0 0.0
    %1097 = vmatprep.subr.mxu0 0.0
    %1098 = vmatpush2.xpose.msra.mxu0 0.0
    %1099 = vmatprep.subr.mxu0 0.0
    %1100 = vmatpush2.xpose.msra.mxu0 0.0
    %1101 = vmatprep.subr.mxu0 0.0
    %1102 = vmatpush2.xpose.msra.mxu0 0.0
    %1103 = vmatprep.subr.mxu0 0.0
    %1104 = vmatpush2.xpose.msra.mxu0 0.0
    %1105 = vmatprep.subr.mxu0 0.0
    %1106 = vmatpush2.xpose.msra.mxu0 0.0
    %1107 = vmatprep.subr.mxu0 0.0
    %1108 = vmatpush2.xpose.msra.mxu0 0.0
    %1109 = vmatprep.subr.mxu0 0.0
    %1110 = vmatpush2.xpose.msra.mxu0 0.0
    %1111 = vmatprep.subr.mxu0 0.0
    %1112 = vmatpush2.xpose.msra.mxu0 0.0
    %1113 = vmatprep.subr.mxu0 0.0
    %1114 = vmatpush2.xpose.msra.mxu0 0.0
    %1115 = vmatprep.subr.mxu0 0.0
    %1116 = vmatpush2.xpose.msra.mxu0 0.0
    %1117 = vmatprep.subr.mxu0 0.0
    %1118 = vmatpush2.xpose.msra.mxu0 0.0
    %1119 = vmatprep.subr.mxu0 0.0
    %1120 = vmatpush2.xpose.msra.mxu0 0.0
    %1121 = vmatprep.subr.mxu0 0.0
    %1122 = vmatpush2.xpose.msra.mxu0 0.0
    %1123 = vmatprep.mubr.f32.mxu0 0.0
    %1124 = vmatmul.mubr.f32.gmra.mxu0 %v1055
    %v1125 = vpop.f32.mrf.mxu0
    %v1126 = vadd.f32 %v221, %v1125
    %v1127 = vpop.f32.mrf.mxu0
    %1128 = vdwg.mxu0
    %1129 = vrot.lane.b32.xlu0 %v213, 112
    %v1130 = vpop.permute.xlu0 %1129
    %1131 = vrot.lane.b32.xlu0 %v213, 80
    %v1132 = vpop.permute.xlu0 %1131
    %v1133 = vsel %vm231, %v1130, 0
    %v1135 = vsel %vm231, %v1132, 0
    %1137 = vmatprep.subr.mxu0 0.0
    %1138 = vmatpush1.xpose.msra.mxu0 0.0
    %1139 = vmatprep.subr.mxu0 0.0
    %1140 = vmatpush1.xpose.msra.mxu0 0.0
    %1141 = vmatprep.subr.mxu0 0.0
    %1142 = vmatpush1.xpose.msra.mxu0 0.0
    %1143 = vmatprep.subr.mxu0 0.0
    %1144 = vmatpush1.xpose.msra.mxu0 0.0
    %1145 = vmatprep.subr.mxu0 0.0
    %1146 = vmatpush1.xpose.msra.mxu0 0.0
    %1147 = vmatprep.subr.mxu0 0.0
    %1148 = vmatpush1.xpose.msra.mxu0 0.0
    %1149 = vmatprep.subr.mxu0 0.0
    %1150 = vmatpush1.xpose.msra.mxu0 0.0
    %1151 = vmatprep.subr.mxu0 0.0
    %1152 = vmatpush1.xpose.msra.mxu0 0.0
    %1153 = vmatprep.subr.mxu0 0.0
    %1154 = vmatpush1.xpose.msra.mxu0 0.0
    %1155 = vmatprep.subr.mxu0 0.0
    %1156 = vmatpush1.xpose.msra.mxu0 0.0
    %1157 = vmatprep.subr.mxu0 0.0
    %1158 = vmatpush1.xpose.msra.mxu0 0.0
    %1159 = vmatprep.subr.mxu0 0.0
    %1160 = vmatpush1.xpose.msra.mxu0 0.0
    %1161 = vmatprep.subr.mxu0 0.0
    %1162 = vmatpush1.xpose.msra.mxu0 0.0
    %1163 = vmatprep.subr.mxu0 0.0
    %1164 = vmatpush1.xpose.msra.mxu0 0.0
    %1165 = vmatprep.subr.mxu0 0.0
    %1166 = vmatpush1.xpose.msra.mxu0 0.0
    %1167 = vmatprep.subr.mxu0 0.0
    %1168 = vmatpush1.xpose.msra.mxu0 %v1135
    %1169 = vmatprep.subr.mxu0 0.0
    %1170 = vmatpush2.xpose.msra.mxu0 0.0
    %1171 = vmatprep.subr.mxu0 0.0
    %1172 = vmatpush2.xpose.msra.mxu0 0.0
    %1173 = vmatprep.subr.mxu0 0.0
    %1174 = vmatpush2.xpose.msra.mxu0 0.0
    %1175 = vmatprep.subr.mxu0 0.0
    %1176 = vmatpush2.xpose.msra.mxu0 0.0
    %1177 = vmatprep.subr.mxu0 0.0
    %1178 = vmatpush2.xpose.msra.mxu0 0.0
    %1179 = vmatprep.subr.mxu0 0.0
    %1180 = vmatpush2.xpose.msra.mxu0 0.0
    %1181 = vmatprep.subr.mxu0 0.0
    %1182 = vmatpush2.xpose.msra.mxu0 0.0
    %1183 = vmatprep.subr.mxu0 0.0
    %1184 = vmatpush2.xpose.msra.mxu0 0.0
    %1185 = vmatprep.subr.mxu0 0.0
    %1186 = vmatpush2.xpose.msra.mxu0 0.0
    %1187 = vmatprep.subr.mxu0 0.0
    %1188 = vmatpush2.xpose.msra.mxu0 0.0
    %1189 = vmatprep.subr.mxu0 0.0
    %1190 = vmatpush2.xpose.msra.mxu0 0.0
    %1191 = vmatprep.subr.mxu0 0.0
    %1192 = vmatpush2.xpose.msra.mxu0 0.0
    %1193 = vmatprep.subr.mxu0 0.0
    %1194 = vmatpush2.xpose.msra.mxu0 0.0
    %1195 = vmatprep.subr.mxu0 0.0
    %1196 = vmatpush2.xpose.msra.mxu0 0.0
    %1197 = vmatprep.subr.mxu0 0.0
    %1198 = vmatpush2.xpose.msra.mxu0 0.0
    %1199 = vmatprep.subr.mxu0 0.0
    %1200 = vmatpush2.xpose.msra.mxu0 0.0
    %1201 = vmatprep.mubr.f32.mxu0 0.0
    %1202 = vmatmul.mubr.f32.gmra.mxu0 %v1133
    %v1203 = vpop.f32.mrf.mxu0
    %v1204 = vadd.f32 %v225, %v1203
    %v1205 = vpop.f32.mrf.mxu0
    %1206 = vdwg.mxu0
    %v1207 = vsel %vm231, %v1126, -inf
    %1208 = vmax.xlane.f32.xlu0 %v1207
    %v1209 = vpop.xlane.xlu0 %1208
    %v1210 = vsel %vm231, %v1204, -inf
    %1211 = vmax.xlane.f32.xlu0 %v1210
    %v1212 = vpop.xlane.xlu0 %1211
    %v1213 = vsub.f32 %v1126, %v1209
    %v1214 = vsub.f32 %v1204, %v1212
    %v1215 = vmul.f32 %v1213, 1.442695
    %v1216 = vpow.pop %v1215
    %v1217 = vmul.f32 %v1214, 1.442695
    %v1218 = vpow.pop %v1217
    %v1219 = vsel %vm231, %v1216, 0.0
    %1220 = vadd.xlane.f32.xlu0 %v1219
    %v1221 = vpop.xlane.xlu0 %1220
    %v1222 = vsel %vm231, %v1218, 0.0
    %1223 = vadd.xlane.f32.xlu0 %v1222
    %v1224 = vpop.xlane.xlu0 %1223
    %v1225 = vrcp.pop %v1221
    %v1226 = vrcp.pop %v1224
    %v1227 = vmul.f32 %v1216, %v1225
    %v1228 = vmul.f32 %v1218, %v1226
    %1229 = vrot.lane.b32.xlu0 %v208, 48
    %v1230 = vpop.permute.xlu0 %1229
    %v1233 = vsel %vm231, %v1227, 0
    %1235 = vmatprep.subr.mxu0 0.0
    %1236 = vmatpush1.msra.mxu0 0.0
    %1237 = vmatprep.subr.mxu0 0.0
    %1238 = vmatpush1.msra.mxu0 0.0
    %1239 = vmatprep.subr.mxu0 0.0
    %1240 = vmatpush1.msra.mxu0 0.0
    %1241 = vmatprep.subr.mxu0 0.0
    %1242 = vmatpush1.msra.mxu0 0.0
    %1243 = vmatprep.subr.mxu0 0.0
    %1244 = vmatpush1.msra.mxu0 0.0
    %1245 = vmatprep.subr.mxu0 0.0
    %1246 = vmatpush1.msra.mxu0 0.0
    %1247 = vmatprep.subr.mxu0 0.0
    %1248 = vmatpush1.msra.mxu0 0.0
    %1249 = vmatprep.subr.mxu0 0.0
    %1250 = vmatpush1.msra.mxu0 0.0
    %1251 = vmatprep.subr.mxu0 0.0
    %1252 = vmatpush1.msra.mxu0 0.0
    %1253 = vmatprep.subr.mxu0 0.0
    %1254 = vmatpush1.msra.mxu0 0.0
    %1255 = vmatprep.subr.mxu0 0.0
    %1256 = vmatpush1.msra.mxu0 0.0
    %1257 = vmatprep.subr.mxu0 0.0
    %1258 = vmatpush1.msra.mxu0 0.0
    %1259 = vmatprep.subr.mxu0 0.0
    %1260 = vmatpush1.msra.mxu0 0.0
    %1261 = vmatprep.subr.mxu0 0.0
    %1262 = vmatpush1.msra.mxu0 0.0
    %1263 = vmatprep.subr.mxu0 0.0
    %1264 = vmatpush1.msra.mxu0 0.0
    %1265 = vmatprep.subr.mxu0 0.0
    %1266 = vmatpush1.msra.mxu0 %v1230
    %1267 = vmatprep.subr.mxu0 0.0
    %1268 = vmatpush2.msra.mxu0 0.0
    %1269 = vmatprep.subr.mxu0 0.0
    %1270 = vmatpush2.msra.mxu0 0.0
    %1271 = vmatprep.subr.mxu0 0.0
    %1272 = vmatpush2.msra.mxu0 0.0
    %1273 = vmatprep.subr.mxu0 0.0
    %1274 = vmatpush2.msra.mxu0 0.0
    %1275 = vmatprep.subr.mxu0 0.0
    %1276 = vmatpush2.msra.mxu0 0.0
    %1277 = vmatprep.subr.mxu0 0.0
    %1278 = vmatpush2.msra.mxu0 0.0
    %1279 = vmatprep.subr.mxu0 0.0
    %1280 = vmatpush2.msra.mxu0 0.0
    %1281 = vmatprep.subr.mxu0 0.0
    %1282 = vmatpush2.msra.mxu0 0.0
    %1283 = vmatprep.subr.mxu0 0.0
    %1284 = vmatpush2.msra.mxu0 0.0
    %1285 = vmatprep.subr.mxu0 0.0
    %1286 = vmatpush2.msra.mxu0 0.0
    %1287 = vmatprep.subr.mxu0 0.0
    %1288 = vmatpush2.msra.mxu0 0.0
    %1289 = vmatprep.subr.mxu0 0.0
    %1290 = vmatpush2.msra.mxu0 0.0
    %1291 = vmatprep.subr.mxu0 0.0
    %1292 = vmatpush2.msra.mxu0 0.0
    %1293 = vmatprep.subr.mxu0 0.0
    %1294 = vmatpush2.msra.mxu0 0.0
    %1295 = vmatprep.subr.mxu0 0.0
    %1296 = vmatpush2.msra.mxu0 0.0
    %1297 = vmatprep.subr.mxu0 0.0
    %1298 = vmatpush2.msra.mxu0 0.0
    %1299 = vmatprep.mubr.f32.mxu0 0.0
    %1300 = vmatmul.mubr.f32.gmra.mxu0 %v1233
    %v1301 = vpop.f32.mrf.mxu0
    %v1302 = vadd.f32 0.0, %v1301
    %v1303 = vpop.f32.mrf.mxu0
    %1304 = vdwg.mxu0
    %1305 = vrot.lane.b32.xlu0 %v213, 48
    %v1306 = vpop.permute.xlu0 %1305
    %v1309 = vsel %vm231, %v1228, 0
    %1311 = vmatprep.subr.mxu0 0.0
    %1312 = vmatpush1.msra.mxu0 0.0
    %1313 = vmatprep.subr.mxu0 0.0
    %1314 = vmatpush1.msra.mxu0 0.0
    %1315 = vmatprep.subr.mxu0 0.0
    %1316 = vmatpush1.msra.mxu0 0.0
    %1317 = vmatprep.subr.mxu0 0.0
    %1318 = vmatpush1.msra.mxu0 0.0
    %1319 = vmatprep.subr.mxu0 0.0
    %1320 = vmatpush1.msra.mxu0 0.0
    %1321 = vmatprep.subr.mxu0 0.0
    %1322 = vmatpush1.msra.mxu0 0.0
    %1323 = vmatprep.subr.mxu0 0.0
    %1324 = vmatpush1.msra.mxu0 0.0
    %1325 = vmatprep.subr.mxu0 0.0
    %1326 = vmatpush1.msra.mxu0 0.0
    %1327 = vmatprep.subr.mxu0 0.0
    %1328 = vmatpush1.msra.mxu0 0.0
    %1329 = vmatprep.subr.mxu0 0.0
    %1330 = vmatpush1.msra.mxu0 0.0
    %1331 = vmatprep.subr.mxu0 0.0
    %1332 = vmatpush1.msra.mxu0 0.0
    %1333 = vmatprep.subr.mxu0 0.0
    %1334 = vmatpush1.msra.mxu0 0.0
    %1335 = vmatprep.subr.mxu0 0.0
    %1336 = vmatpush1.msra.mxu0 0.0
    %1337 = vmatprep.subr.mxu0 0.0
    %1338 = vmatpush1.msra.mxu0 0.0
    %1339 = vmatprep.subr.mxu0 0.0
    %1340 = vmatpush1.msra.mxu0 0.0
    %1341 = vmatprep.subr.mxu0 0.0
    %1342 = vmatpush1.msra.mxu0 %v1306
    %1343 = vmatprep.subr.mxu0 0.0
    %1344 = vmatpush2.msra.mxu0 0.0
    %1345 = vmatprep.subr.mxu0 0.0
    %1346 = vmatpush2.msra.mxu0 0.0
    %1347 = vmatprep.subr.mxu0 0.0
    %1348 = vmatpush2.msra.mxu0 0.0
    %1349 = vmatprep.subr.mxu0 0.0
    %1350 = vmatpush2.msra.mxu0 0.0
    %1351 = vmatprep.subr.mxu0 0.0
    %1352 = vmatpush2.msra.mxu0 0.0
    %1353 = vmatprep.subr.mxu0 0.0
    %1354 = vmatpush2.msra.mxu0 0.0
    %1355 = vmatprep.subr.mxu0 0.0
    %1356 = vmatpush2.msra.mxu0 0.0
    %1357 = vmatprep.subr.mxu0 0.0
    %1358 = vmatpush2.msra.mxu0 0.0
    %1359 = vmatprep.subr.mxu0 0.0
    %1360 = vmatpush2.msra.mxu0 0.0
    %1361 = vmatprep.subr.mxu0 0.0
    %1362 = vmatpush2.msra.mxu0 0.0
    %1363 = vmatprep.subr.mxu0 0.0
    %1364 = vmatpush2.msra.mxu0 0.0
    %1365 = vmatprep.subr.mxu0 0.0
    %1366 = vmatpush2.msra.mxu0 0.0
    %1367 = vmatprep.subr.mxu0 0.0
    %1368 = vmatpush2.msra.mxu0 0.0
    %1369 = vmatprep.subr.mxu0 0.0
    %1370 = vmatpush2.msra.mxu0 0.0
    %1371 = vmatprep.subr.mxu0 0.0
    %1372 = vmatpush2.msra.mxu0 0.0
    %1373 = vmatprep.subr.mxu0 0.0
    %1374 = vmatpush2.msra.mxu0 0.0
    %1375 = vmatprep.mubr.f32.mxu0 0.0
    %1376 = vmatmul.mubr.f32.gmra.mxu0 %v1309
    %v1377 = vpop.f32.mrf.mxu0
    %v1378 = vadd.f32 0.0, %v1377
    %v1379 = vpop.f32.mrf.mxu0
    %1380 = vdwg.mxu0
    %v1381 = vld [vmem:[%s6 + $0x10] sm:$0xff]
    %v1383 = vsel %vm231, %v1302, 0
    %v1386 = vsel %vm231, %v1378, 0
    %1388 = vmatprep.subr.mxu0 0.0
    %1389 = vmatpush1.msra.mxu0 0.0
    %1390 = vmatprep.subr.mxu0 0.0
    %1391 = vmatpush1.msra.mxu0 0.0
    %1392 = vmatprep.subr.mxu0 0.0
    %1393 = vmatpush1.msra.mxu0 0.0
    %1394 = vmatprep.subr.mxu0 0.0
    %1395 = vmatpush1.msra.mxu0 0.0
    %1396 = vmatprep.subr.mxu0 0.0
    %1397 = vmatpush1.msra.mxu0 0.0
    %1398 = vmatprep.subr.mxu0 0.0
    %1399 = vmatpush1.msra.mxu0 0.0
    %1400 = vmatprep.subr.mxu0 0.0
    %1401 = vmatpush1.msra.mxu0 0.0
    %1402 = vmatprep.subr.mxu0 0.0
    %1403 = vmatpush1.msra.mxu0 0.0
    %1404 = vmatprep.subr.mxu0 0.0
    %1405 = vmatpush1.msra.mxu0 0.0
    %1406 = vmatprep.subr.mxu0 0.0
    %1407 = vmatpush1.msra.mxu0 0.0
    %1408 = vmatprep.subr.mxu0 0.0
    %1409 = vmatpush1.msra.mxu0 0.0
    %1410 = vmatprep.subr.mxu0 0.0
    %1411 = vmatpush1.msra.mxu0 0.0
    %1412 = vmatprep.subr.mxu0 0.0
    %1413 = vmatpush1.msra.mxu0 0.0
    %1414 = vmatprep.subr.mxu0 0.0
    %1415 = vmatpush1.msra.mxu0 0.0
    %1416 = vmatprep.subr.mxu0 0.0
    %1417 = vmatpush1.msra.mxu0 0.0
    %1418 = vmatprep.subr.mxu0 0.0
    %1419 = vmatpush1.msra.mxu0 %v1381
    %1420 = vmatprep.subr.mxu0 0.0
    %1421 = vmatpush2.msra.mxu0 0.0
    %1422 = vmatprep.subr.mxu0 0.0
    %1423 = vmatpush2.msra.mxu0 0.0
    %1424 = vmatprep.subr.mxu0 0.0
    %1425 = vmatpush2.msra.mxu0 0.0
    %1426 = vmatprep.subr.mxu0 0.0
    %1427 = vmatpush2.msra.mxu0 0.0
    %1428 = vmatprep.subr.mxu0 0.0
    %1429 = vmatpush2.msra.mxu0 0.0
    %1430 = vmatprep.subr.mxu0 0.0
    %1431 = vmatpush2.msra.mxu0 0.0
    %1432 = vmatprep.subr.mxu0 0.0
    %1433 = vmatpush2.msra.mxu0 0.0
    %1434 = vmatprep.subr.mxu0 0.0
    %1435 = vmatpush2.msra.mxu0 0.0
    %1436 = vmatprep.subr.mxu0 0.0
    %1437 = vmatpush2.msra.mxu0 0.0
    %1438 = vmatprep.subr.mxu0 0.0
    %1439 = vmatpush2.msra.mxu0 0.0
    %1440 = vmatprep.subr.mxu0 0.0
    %1441 = vmatpush2.msra.mxu0 0.0
    %1442 = vmatprep.subr.mxu0 0.0
    %1443 = vmatpush2.msra.mxu0 0.0
    %1444 = vmatprep.subr.mxu0 0.0
    %1445 = vmatpush2.msra.mxu0 0.0
    %1446 = vmatprep.subr.mxu0 0.0
    %1447 = vmatpush2.msra.mxu0 0.0
    %1448 = vmatprep.subr.mxu0 0.0
    %1449 = vmatpush2.msra.mxu0 0.0
    %1450 = vmatprep.subr.mxu0 0.0
    %1451 = vmatpush2.msra.mxu0 0.0
    %1452 = vmatprep.mubr.f32.mxu0 0.0
    %1453 = vmatmul.mubr.f32.gmra.mxu0 %v1383
    %v1454 = vpop.f32.mrf.mxu0
    %v1455 = vadd.f32 0.0, %v1454
    %v1456 = vpop.f32.mrf.mxu0
    %1457 = vmatprep.mubr.f32.mxu0 0.0
    %1458 = vmatmul.mubr.f32.gmra.mxu0 %v1386
    %v1459 = vpop.f32.mrf.mxu0
    %v1460 = vadd.f32 0.0, %v1459
    %v1461 = vpop.f32.mrf.mxu0
    %1462 = vdwg.mxu0
    %v1463 = vadd.f32 %v1043, %v1455
    %v1464 = vadd.f32 %v1048, %v1460
    %1465 = vrot.lane.b32.xlu0 %v208, 104
    %v1466 = vpop.permute.xlu0 %1465
    %1467 = vrot.lane.b32.xlu0 %v208, 72
    %v1468 = vpop.permute.xlu0 %1467
    %v1469 = vsel %vm231, %v1466, 0
    %v1471 = vsel %vm231, %v1468, 0
    %1473 = vmatprep.subr.mxu0 0.0
    %1474 = vmatpush1.xpose.msra.mxu0 0.0
    %1475 = vmatprep.subr.mxu0 0.0
    %1476 = vmatpush1.xpose.msra.mxu0 0.0
    %1477 = vmatprep.subr.mxu0 0.0
    %1478 = vmatpush1.xpose.msra.mxu0 0.0
    %1479 = vmatprep.subr.mxu0 0.0
    %1480 = vmatpush1.xpose.msra.mxu0 0.0
    %1481 = vmatprep.subr.mxu0 0.0
    %1482 = vmatpush1.xpose.msra.mxu0 0.0
    %1483 = vmatprep.subr.mxu0 0.0
    %1484 = vmatpush1.xpose.msra.mxu0 0.0
    %1485 = vmatprep.subr.mxu0 0.0
    %1486 = vmatpush1.xpose.msra.mxu0 0.0
    %1487 = vmatprep.subr.mxu0 0.0
    %1488 = vmatpush1.xpose.msra.mxu0 0.0
    %1489 = vmatprep.subr.mxu0 0.0
    %1490 = vmatpush1.xpose.msra.mxu0 0.0
    %1491 = vmatprep.subr.mxu0 0.0
    %1492 = vmatpush1.xpose.msra.mxu0 0.0
    %1493 = vmatprep.subr.mxu0 0.0
    %1494 = vmatpush1.xpose.msra.mxu0 0.0
    %1495 = vmatprep.subr.mxu0 0.0
    %1496 = vmatpush1.xpose.msra.mxu0 0.0
    %1497 = vmatprep.subr.mxu0 0.0
    %1498 = vmatpush1.xpose.msra.mxu0 0.0
    %1499 = vmatprep.subr.mxu0 0.0
    %1500 = vmatpush1.xpose.msra.mxu0 0.0
    %1501 = vmatprep.subr.mxu0 0.0
    %1502 = vmatpush1.xpose.msra.mxu0 0.0
    %1503 = vmatprep.subr.mxu0 0.0
    %1504 = vmatpush1.xpose.msra.mxu0 %v1471
    %1505 = vmatprep.subr.mxu0 0.0
    %1506 = vmatpush2.xpose.msra.mxu0 0.0
    %1507 = vmatprep.subr.mxu0 0.0
    %1508 = vmatpush2.xpose.msra.mxu0 0.0
    %1509 = vmatprep.subr.mxu0 0.0
    %1510 = vmatpush2.xpose.msra.mxu0 0.0
    %1511 = vmatprep.subr.mxu0 0.0
    %1512 = vmatpush2.xpose.msra.mxu0 0.0
    %1513 = vmatprep.subr.mxu0 0.0
    %1514 = vmatpush2.xpose.msra.mxu0 0.0
    %1515 = vmatprep.subr.mxu0 0.0
    %1516 = vmatpush2.xpose.msra.mxu0 0.0
    %1517 = vmatprep.subr.mxu0 0.0
    %1518 = vmatpush2.xpose.msra.mxu0 0.0
    %1519 = vmatprep.subr.mxu0 0.0
    %1520 = vmatpush2.xpose.msra.mxu0 0.0
    %1521 = vmatprep.subr.mxu0 0.0
    %1522 = vmatpush2.xpose.msra.mxu0 0.0
    %1523 = vmatprep.subr.mxu0 0.0
    %1524 = vmatpush2.xpose.msra.mxu0 0.0
    %1525 = vmatprep.subr.mxu0 0.0
    %1526 = vmatpush2.xpose.msra.mxu0 0.0
    %1527 = vmatprep.subr.mxu0 0.0
    %1528 = vmatpush2.xpose.msra.mxu0 0.0
    %1529 = vmatprep.subr.mxu0 0.0
    %1530 = vmatpush2.xpose.msra.mxu0 0.0
    %1531 = vmatprep.subr.mxu0 0.0
    %1532 = vmatpush2.xpose.msra.mxu0 0.0
    %1533 = vmatprep.subr.mxu0 0.0
    %1534 = vmatpush2.xpose.msra.mxu0 0.0
    %1535 = vmatprep.subr.mxu0 0.0
    %1536 = vmatpush2.xpose.msra.mxu0 0.0
    %1537 = vmatprep.mubr.f32.mxu0 0.0
    %1538 = vmatmul.mubr.f32.gmra.mxu0 %v1469
    %v1539 = vpop.f32.mrf.mxu0
    %v1540 = vadd.f32 %v221, %v1539
    %v1541 = vpop.f32.mrf.mxu0
    %1542 = vdwg.mxu0
    %1543 = vrot.lane.b32.xlu0 %v213, 104
    %v1544 = vpop.permute.xlu0 %1543
    %1545 = vrot.lane.b32.xlu0 %v213, 72
    %v1546 = vpop.permute.xlu0 %1545
    %v1547 = vsel %vm231, %v1544, 0
    %v1549 = vsel %vm231, %v1546, 0
    %1551 = vmatprep.subr.mxu0 0.0
    %1552 = vmatpush1.xpose.msra.mxu0 0.0
    %1553 = vmatprep.subr.mxu0 0.0
    %1554 = vmatpush1.xpose.msra.mxu0 0.0
    %1555 = vmatprep.subr.mxu0 0.0
    %1556 = vmatpush1.xpose.msra.mxu0 0.0
    %1557 = vmatprep.subr.mxu0 0.0
    %1558 = vmatpush1.xpose.msra.mxu0 0.0
    %1559 = vmatprep.subr.mxu0 0.0
    %1560 = vmatpush1.xpose.msra.mxu0 0.0
    %1561 = vmatprep.subr.mxu0 0.0
    %1562 = vmatpush1.xpose.msra.mxu0 0.0
    %1563 = vmatprep.subr.mxu0 0.0
    %1564 = vmatpush1.xpose.msra.mxu0 0.0
    %1565 = vmatprep.subr.mxu0 0.0
    %1566 = vmatpush1.xpose.msra.mxu0 0.0
    %1567 = vmatprep.subr.mxu0 0.0
    %1568 = vmatpush1.xpose.msra.mxu0 0.0
    %1569 = vmatprep.subr.mxu0 0.0
    %1570 = vmatpush1.xpose.msra.mxu0 0.0
    %1571 = vmatprep.subr.mxu0 0.0
    %1572 = vmatpush1.xpose.msra.mxu0 0.0
    %1573 = vmatprep.subr.mxu0 0.0
    %1574 = vmatpush1.xpose.msra.mxu0 0.0
    %1575 = vmatprep.subr.mxu0 0.0
    %1576 = vmatpush1.xpose.msra.mxu0 0.0
    %1577 = vmatprep.subr.mxu0 0.0
    %1578 = vmatpush1.xpose.msra.mxu0 0.0
    %1579 = vmatprep.subr.mxu0 0.0
    %1580 = vmatpush1.xpose.msra.mxu0 0.0
    %1581 = vmatprep.subr.mxu0 0.0
    %1582 = vmatpush1.xpose.msra.mxu0 %v1549
    %1583 = vmatprep.subr.mxu0 0.0
    %1584 = vmatpush2.xpose.msra.mxu0 0.0
    %1585 = vmatprep.subr.mxu0 0.0
    %1586 = vmatpush2.xpose.msra.mxu0 0.0
    %1587 = vmatprep.subr.mxu0 0.0
    %1588 = vmatpush2.xpose.msra.mxu0 0.0
    %1589 = vmatprep.subr.mxu0 0.0
    %1590 = vmatpush2.xpose.msra.mxu0 0.0
    %1591 = vmatprep.subr.mxu0 0.0
    %1592 = vmatpush2.xpose.msra.mxu0 0.0
    %1593 = vmatprep.subr.mxu0 0.0
    %1594 = vmatpush2.xpose.msra.mxu0 0.0
    %1595 = vmatprep.subr.mxu0 0.0
    %1596 = vmatpush2.xpose.msra.mxu0 0.0
    %1597 = vmatprep.subr.mxu0 0.0
    %1598 = vmatpush2.xpose.msra.mxu0 0.0
    %1599 = vmatprep.subr.mxu0 0.0
    %1600 = vmatpush2.xpose.msra.mxu0 0.0
    %1601 = vmatprep.subr.mxu0 0.0
    %1602 = vmatpush2.xpose.msra.mxu0 0.0
    %1603 = vmatprep.subr.mxu0 0.0
    %1604 = vmatpush2.xpose.msra.mxu0 0.0
    %1605 = vmatprep.subr.mxu0 0.0
    %1606 = vmatpush2.xpose.msra.mxu0 0.0
    %1607 = vmatprep.subr.mxu0 0.0
    %1608 = vmatpush2.xpose.msra.mxu0 0.0
    %1609 = vmatprep.subr.mxu0 0.0
    %1610 = vmatpush2.xpose.msra.mxu0 0.0
    %1611 = vmatprep.subr.mxu0 0.0
    %1612 = vmatpush2.xpose.msra.mxu0 0.0
    %1613 = vmatprep.subr.mxu0 0.0
    %1614 = vmatpush2.xpose.msra.mxu0 0.0
    %1615 = vmatprep.mubr.f32.mxu0 0.0
    %1616 = vmatmul.mubr.f32.gmra.mxu0 %v1547
    %v1617 = vpop.f32.mrf.mxu0
    %v1618 = vadd.f32 %v225, %v1617
    %v1619 = vpop.f32.mrf.mxu0
    %1620 = vdwg.mxu0
    %v1621 = vsel %vm231, %v1540, -inf
    %1622 = vmax.xlane.f32.xlu0 %v1621
    %v1623 = vpop.xlane.xlu0 %1622
    %v1624 = vsel %vm231, %v1618, -inf
    %1625 = vmax.xlane.f32.xlu0 %v1624
    %v1626 = vpop.xlane.xlu0 %1625
    %v1627 = vsub.f32 %v1540, %v1623
    %v1628 = vsub.f32 %v1618, %v1626
    %v1629 = vmul.f32 %v1627, 1.442695
    %v1630 = vpow.pop %v1629
    %v1631 = vmul.f32 %v1628, 1.442695
    %v1632 = vpow.pop %v1631
    %v1633 = vsel %vm231, %v1630, 0.0
    %1634 = vadd.xlane.f32.xlu0 %v1633
    %v1635 = vpop.xlane.xlu0 %1634
    %v1636 = vsel %vm231, %v1632, 0.0
    %1637 = vadd.xlane.f32.xlu0 %v1636
    %v1638 = vpop.xlane.xlu0 %1637
    %v1639 = vrcp.pop %v1635
    %v1640 = vrcp.pop %v1638
    %v1641 = vmul.f32 %v1630, %v1639
    %v1642 = vmul.f32 %v1632, %v1640
    %1643 = vrot.lane.b32.xlu0 %v208, 40
    %v1644 = vpop.permute.xlu0 %1643
    %v1647 = vsel %vm231, %v1641, 0
    %1649 = vmatprep.subr.mxu0 0.0
    %1650 = vmatpush1.msra.mxu0 0.0
    %1651 = vmatprep.subr.mxu0 0.0
    %1652 = vmatpush1.msra.mxu0 0.0
    %1653 = vmatprep.subr.mxu0 0.0
    %1654 = vmatpush1.msra.mxu0 0.0
    %1655 = vmatprep.subr.mxu0 0.0
    %1656 = vmatpush1.msra.mxu0 0.0
    %1657 = vmatprep.subr.mxu0 0.0
    %1658 = vmatpush1.msra.mxu0 0.0
    %1659 = vmatprep.subr.mxu0 0.0
    %1660 = vmatpush1.msra.mxu0 0.0
    %1661 = vmatprep.subr.mxu0 0.0
    %1662 = vmatpush1.msra.mxu0 0.0
    %1663 = vmatprep.subr.mxu0 0.0
    %1664 = vmatpush1.msra.mxu0 0.0
    %1665 = vmatprep.subr.mxu0 0.0
    %1666 = vmatpush1.msra.mxu0 0.0
    %1667 = vmatprep.subr.mxu0 0.0
    %1668 = vmatpush1.msra.mxu0 0.0
    %1669 = vmatprep.subr.mxu0 0.0
    %1670 = vmatpush1.msra.mxu0 0.0
    %1671 = vmatprep.subr.mxu0 0.0
    %1672 = vmatpush1.msra.mxu0 0.0
    %1673 = vmatprep.subr.mxu0 0.0
    %1674 = vmatpush1.msra.mxu0 0.0
    %1675 = vmatprep.subr.mxu0 0.0
    %1676 = vmatpush1.msra.mxu0 0.0
    %1677 = vmatprep.subr.mxu0 0.0
    %1678 = vmatpush1.msra.mxu0 0.0
    %1679 = vmatprep.subr.mxu0 0.0
    %1680 = vmatpush1.msra.mxu0 %v1644
    %1681 = vmatprep.subr.mxu0 0.0
    %1682 = vmatpush2.msra.mxu0 0.0
    %1683 = vmatprep.subr.mxu0 0.0
    %1684 = vmatpush2.msra.mxu0 0.0
    %1685 = vmatprep.subr.mxu0 0.0
    %1686 = vmatpush2.msra.mxu0 0.0
    %1687 = vmatprep.subr.mxu0 0.0
    %1688 = vmatpush2.msra.mxu0 0.0
    %1689 = vmatprep.subr.mxu0 0.0
    %1690 = vmatpush2.msra.mxu0 0.0
    %1691 = vmatprep.subr.mxu0 0.0
    %1692 = vmatpush2.msra.mxu0 0.0
    %1693 = vmatprep.subr.mxu0 0.0
    %1694 = vmatpush2.msra.mxu0 0.0
    %1695 = vmatprep.subr.mxu0 0.0
    %1696 = vmatpush2.msra.mxu0 0.0
    %1697 = vmatprep.subr.mxu0 0.0
    %1698 = vmatpush2.msra.mxu0 0.0
    %1699 = vmatprep.subr.mxu0 0.0
    %1700 = vmatpush2.msra.mxu0 0.0
    %1701 = vmatprep.subr.mxu0 0.0
    %1702 = vmatpush2.msra.mxu0 0.0
    %1703 = vmatprep.subr.mxu0 0.0
    %1704 = vmatpush2.msra.mxu0 0.0
    %1705 = vmatprep.subr.mxu0 0.0
    %1706 = vmatpush2.msra.mxu0 0.0
    %1707 = vmatprep.subr.mxu0 0.0
    %1708 = vmatpush2.msra.mxu0 0.0
    %1709 = vmatprep.subr.mxu0 0.0
    %1710 = vmatpush2.msra.mxu0 0.0
    %1711 = vmatprep.subr.mxu0 0.0
    %1712 = vmatpush2.msra.mxu0 0.0
    %1713 = vmatprep.mubr.f32.mxu0 0.0
    %1714 = vmatmul.mubr.f32.gmra.mxu0 %v1647
    %v1715 = vpop.f32.mrf.mxu0
    %v1716 = vadd.f32 0.0, %v1715
    %v1717 = vpop.f32.mrf.mxu0
    %1718 = vdwg.mxu0
    %1719 = vrot.lane.b32.xlu0 %v213, 40
    %v1720 = vpop.permute.xlu0 %1719
    %v1723 = vsel %vm231, %v1642, 0
    %1725 = vmatprep.subr.mxu0 0.0
    %1726 = vmatpush1.msra.mxu0 0.0
    %1727 = vmatprep.subr.mxu0 0.0
    %1728 = vmatpush1.msra.mxu0 0.0
    %1729 = vmatprep.subr.mxu0 0.0
    %1730 = vmatpush1.msra.mxu0 0.0
    %1731 = vmatprep.subr.mxu0 0.0
    %1732 = vmatpush1.msra.mxu0 0.0
    %1733 = vmatprep.subr.mxu0 0.0
    %1734 = vmatpush1.msra.mxu0 0.0
    %1735 = vmatprep.subr.mxu0 0.0
    %1736 = vmatpush1.msra.mxu0 0.0
    %1737 = vmatprep.subr.mxu0 0.0
    %1738 = vmatpush1.msra.mxu0 0.0
    %1739 = vmatprep.subr.mxu0 0.0
    %1740 = vmatpush1.msra.mxu0 0.0
    %1741 = vmatprep.subr.mxu0 0.0
    %1742 = vmatpush1.msra.mxu0 0.0
    %1743 = vmatprep.subr.mxu0 0.0
    %1744 = vmatpush1.msra.mxu0 0.0
    %1745 = vmatprep.subr.mxu0 0.0
    %1746 = vmatpush1.msra.mxu0 0.0
    %1747 = vmatprep.subr.mxu0 0.0
    %1748 = vmatpush1.msra.mxu0 0.0
    %1749 = vmatprep.subr.mxu0 0.0
    %1750 = vmatpush1.msra.mxu0 0.0
    %1751 = vmatprep.subr.mxu0 0.0
    %1752 = vmatpush1.msra.mxu0 0.0
    %1753 = vmatprep.subr.mxu0 0.0
    %1754 = vmatpush1.msra.mxu0 0.0
    %1755 = vmatprep.subr.mxu0 0.0
    %1756 = vmatpush1.msra.mxu0 %v1720
    %1757 = vmatprep.subr.mxu0 0.0
    %1758 = vmatpush2.msra.mxu0 0.0
    %1759 = vmatprep.subr.mxu0 0.0
    %1760 = vmatpush2.msra.mxu0 0.0
    %1761 = vmatprep.subr.mxu0 0.0
    %1762 = vmatpush2.msra.mxu0 0.0
    %1763 = vmatprep.subr.mxu0 0.0
    %1764 = vmatpush2.msra.mxu0 0.0
    %1765 = vmatprep.subr.mxu0 0.0
    %1766 = vmatpush2.msra.mxu0 0.0
    %1767 = vmatprep.subr.mxu0 0.0
    %1768 = vmatpush2.msra.mxu0 0.0
    %1769 = vmatprep.subr.mxu0 0.0
    %1770 = vmatpush2.msra.mxu0 0.0
    %1771 = vmatprep.subr.mxu0 0.0
    %1772 = vmatpush2.msra.mxu0 0.0
    %1773 = vmatprep.subr.mxu0 0.0
    %1774 = vmatpush2.msra.mxu0 0.0
    %1775 = vmatprep.subr.mxu0 0.0
    %1776 = vmatpush2.msra.mxu0 0.0
    %1777 = vmatprep.subr.mxu0 0.0
    %1778 = vmatpush2.msra.mxu0 0.0
    %1779 = vmatprep.subr.mxu0 0.0
    %1780 = vmatpush2.msra.mxu0 0.0
    %1781 = vmatprep.subr.mxu0 0.0
    %1782 = vmatpush2.msra.mxu0 0.0
    %1783 = vmatprep.subr.mxu0 0.0
    %1784 = vmatpush2.msra.mxu0 0.0
    %1785 = vmatprep.subr.mxu0 0.0
    %1786 = vmatpush2.msra.mxu0 0.0
    %1787 = vmatprep.subr.mxu0 0.0
    %1788 = vmatpush2.msra.mxu0 0.0
    %1789 = vmatprep.mubr.f32.mxu0 0.0
    %1790 = vmatmul.mubr.f32.gmra.mxu0 %v1723
    %v1791 = vpop.f32.mrf.mxu0
    %v1792 = vadd.f32 0.0, %v1791
    %v1793 = vpop.f32.mrf.mxu0
    %1794 = vdwg.mxu0
    %v1795 = vld [vmem:[%s6 + $0x18] sm:$0xff]
    %v1797 = vsel %vm231, %v1716, 0
    %v1800 = vsel %vm231, %v1792, 0
    %1802 = vmatprep.subr.mxu0 0.0
    %1803 = vmatpush1.msra.mxu0 0.0
    %1804 = vmatprep.subr.mxu0 0.0
    %1805 = vmatpush1.msra.mxu0 0.0
    %1806 = vmatprep.subr.mxu0 0.0
    %1807 = vmatpush1.msra.mxu0 0.0
    %1808 = vmatprep.subr.mxu0 0.0
    %1809 = vmatpush1.msra.mxu0 0.0
    %1810 = vmatprep.subr.mxu0 0.0
    %1811 = vmatpush1.msra.mxu0 0.0
    %1812 = vmatprep.subr.mxu0 0.0
    %1813 = vmatpush1.msra.mxu0 0.0
    %1814 = vmatprep.subr.mxu0 0.0
    %1815 = vmatpush1.msra.mxu0 0.0
    %1816 = vmatprep.subr.mxu0 0.0
    %1817 = vmatpush1.msra.mxu0 0.0
    %1818 = vmatprep.subr.mxu0 0.0
    %1819 = vmatpush1.msra.mxu0 0.0
    %1820 = vmatprep.subr.mxu0 0.0
    %1821 = vmatpush1.msra.mxu0 0.0
    %1822 = vmatprep.subr.mxu0 0.0
    %1823 = vmatpush1.msra.mxu0 0.0
    %1824 = vmatprep.subr.mxu0 0.0
    %1825 = vmatpush1.msra.mxu0 0.0
    %1826 = vmatprep.subr.mxu0 0.0
    %1827 = vmatpush1.msra.mxu0 0.0
    %1828 = vmatprep.subr.mxu0 0.0
    %1829 = vmatpush1.msra.mxu0 0.0
    %1830 = vmatprep.subr.mxu0 0.0
    %1831 = vmatpush1.msra.mxu0 0.0
    %1832 = vmatprep.subr.mxu0 0.0
    %1833 = vmatpush1.msra.mxu0 %v1795
    %1834 = vmatprep.subr.mxu0 0.0
    %1835 = vmatpush2.msra.mxu0 0.0
    %1836 = vmatprep.subr.mxu0 0.0
    %1837 = vmatpush2.msra.mxu0 0.0
    %1838 = vmatprep.subr.mxu0 0.0
    %1839 = vmatpush2.msra.mxu0 0.0
    %1840 = vmatprep.subr.mxu0 0.0
    %1841 = vmatpush2.msra.mxu0 0.0
    %1842 = vmatprep.subr.mxu0 0.0
    %1843 = vmatpush2.msra.mxu0 0.0
    %1844 = vmatprep.subr.mxu0 0.0
    %1845 = vmatpush2.msra.mxu0 0.0
    %1846 = vmatprep.subr.mxu0 0.0
    %1847 = vmatpush2.msra.mxu0 0.0
    %1848 = vmatprep.subr.mxu0 0.0
    %1849 = vmatpush2.msra.mxu0 0.0
    %1850 = vmatprep.subr.mxu0 0.0
    %1851 = vmatpush2.msra.mxu0 0.0
    %1852 = vmatprep.subr.mxu0 0.0
    %1853 = vmatpush2.msra.mxu0 0.0
    %1854 = vmatprep.subr.mxu0 0.0
    %1855 = vmatpush2.msra.mxu0 0.0
    %1856 = vmatprep.subr.mxu0 0.0
    %1857 = vmatpush2.msra.mxu0 0.0
    %1858 = vmatprep.subr.mxu0 0.0
    %1859 = vmatpush2.msra.mxu0 0.0
    %1860 = vmatprep.subr.mxu0 0.0
    %1861 = vmatpush2.msra.mxu0 0.0
    %1862 = vmatprep.subr.mxu0 0.0
    %1863 = vmatpush2.msra.mxu0 0.0
    %1864 = vmatprep.subr.mxu0 0.0
    %1865 = vmatpush2.msra.mxu0 0.0
    %1866 = vmatprep.mubr.f32.mxu0 0.0
    %1867 = vmatmul.mubr.f32.gmra.mxu0 %v1797
    %v1868 = vpop.f32.mrf.mxu0
    %v1869 = vadd.f32 0.0, %v1868
    %v1870 = vpop.f32.mrf.mxu0
    %1871 = vmatprep.mubr.f32.mxu0 0.0
    %1872 = vmatmul.mubr.f32.gmra.mxu0 %v1800
    %v1873 = vpop.f32.mrf.mxu0
    %v1874 = vadd.f32 0.0, %v1873
    %v1875 = vpop.f32.mrf.mxu0
    %1876 = vdwg.mxu0
    %v1877 = vadd.f32 %v1463, %v1869
    %v1878 = vadd.f32 %v1464, %v1874
    %v1879 = vadd.f32 %v70, %v1877
    %v1880 = vadd.f32 %v71, %v1878
    %v1881 = vld [vmem:[%s7] sm:$0x1]
    %v1883 = vlaneseq
    %v1884 = vshrl.u32 %v1883, 7
    %v1885 = vsub.s32 0, %v1884
    %v1886 = vrot.slane %v1881, %v1885
    %v1888 = vadd.f32 %v1879, %v1886
    %v1889 = vadd.f32 %v1880, %v1886
    %v1890 = vsel %vm80, %v1888, 0.0
    %1891 = vadd.xlane.f32.xlu0 %v1890
    %v1892 = vpop.xlane.xlu0 %1891
    %v1893 = vsel %vm80, %v1889, 0.0
    %1894 = vadd.xlane.f32.xlu0 %v1893
    %v1895 = vpop.xlane.xlu0 %1894
    %v1896 = vmul.f32 %v1892, %v87
    %v1897 = vmul.f32 %v1895, %v87
    %v1898 = vsub.f32 %v1888, %v1896
    %v1899 = vsub.f32 %v1889, %v1897
    %v1900 = vmul.f32 %v1898, %v1898
    %v1901 = vmul.f32 %v1899, %v1899
    %v1902 = vsel %vm80, %v1900, 0.0
    %1903 = vadd.xlane.f32.xlu0 %v1902
    %v1904 = vpop.xlane.xlu0 %1903
    %v1905 = vsel %vm80, %v1901, 0.0
    %1906 = vadd.xlane.f32.xlu0 %v1905
    %v1907 = vpop.xlane.xlu0 %1906
    %v1908 = vmul.f32 %v1904, %v87
    %v1909 = vmul.f32 %v1907, %v87
    %v1910 = vadd.f32 %v1908, 1e-06
    %v1911 = vadd.f32 %v1909, 1e-06
    %v1912 = vrsqrt.pop %v1910
    %v1913 = vrsqrt.pop %v1911
    %v1914 = vmul.f32 %v1898, %v1912
    %v1915 = vmul.f32 %v1899, %v1913
    %v1916 = vmul.f32 %v1914, %v112
    %v1917 = vmul.f32 %v1915, %v112
    %v1918 = vadd.f32 %v1916, %v120
    %v1919 = vadd.f32 %v1917, %v120
    %v1920 = vld [vmem:[%s8] sm:$0xff]
    %v1921 = vld [vmem:[%s8 + $0x8] sm:$0xff]
    %v1922 = vld [vmem:[%s8 + $0x10] sm:$0xff]
    %v1923 = vld [vmem:[%s8 + $0x18] sm:$0xff]
    %v1924 = vld [vmem:[%s9] sm:$0x1]
    %v1926 = vlaneseq
    %v1927 = vshrl.u32 %v1926, 7
    %v1928 = vsub.s32 0, %v1927
    %v1929 = vrot.slane %v1924, %v1928
    %v1932 = vsel %vm80, %v1918, 0
    %v1935 = vsel %vm80, %v1919, 0
    %1937 = vmatprep.subr.mxu0 0.0
    %1938 = vmatpush1.msra.mxu0 0.0
    %1939 = vmatprep.subr.mxu0 0.0
    %1940 = vmatpush1.msra.mxu0 0.0
    %1941 = vmatprep.subr.mxu0 0.0
    %1942 = vmatpush1.msra.mxu0 0.0
    %1943 = vmatprep.subr.mxu0 0.0
    %1944 = vmatpush1.msra.mxu0 0.0
    %1945 = vmatprep.subr.mxu0 0.0
    %1946 = vmatpush1.msra.mxu0 0.0
    %1947 = vmatprep.subr.mxu0 0.0
    %1948 = vmatpush1.msra.mxu0 0.0
    %1949 = vmatprep.subr.mxu0 0.0
    %1950 = vmatpush1.msra.mxu0 0.0
    %1951 = vmatprep.subr.mxu0 0.0
    %1952 = vmatpush1.msra.mxu0 0.0
    %1953 = vmatprep.subr.mxu0 0.0
    %1954 = vmatpush1.msra.mxu0 0.0
    %1955 = vmatprep.subr.mxu0 0.0
    %1956 = vmatpush1.msra.mxu0 0.0
    %1957 = vmatprep.subr.mxu0 0.0
    %1958 = vmatpush1.msra.mxu0 0.0
    %1959 = vmatprep.subr.mxu0 0.0
    %1960 = vmatpush1.msra.mxu0 0.0
    %1961 = vmatprep.subr.mxu0 0.0
    %1962 = vmatpush1.msra.mxu0 %v1923
    %1963 = vmatprep.subr.mxu0 0.0
    %1964 = vmatpush1.msra.mxu0 %v1922
    %1965 = vmatprep.subr.mxu0 0.0
    %1966 = vmatpush1.msra.mxu0 %v1921
    %1967 = vmatprep.subr.mxu0 0.0
    %1968 = vmatpush1.msra.mxu0 %v1920
    %1969 = vmatprep.subr.mxu0 0.0
    %1970 = vmatpush2.msra.mxu0 0.0
    %1971 = vmatprep.subr.mxu0 0.0
    %1972 = vmatpush2.msra.mxu0 0.0
    %1973 = vmatprep.subr.mxu0 0.0
    %1974 = vmatpush2.msra.mxu0 0.0
    %1975 = vmatprep.subr.mxu0 0.0
    %1976 = vmatpush2.msra.mxu0 0.0
    %1977 = vmatprep.subr.mxu0 0.0
    %1978 = vmatpush2.msra.mxu0 0.0
    %1979 = vmatprep.subr.mxu0 0.0
    %1980 = vmatpush2.msra.mxu0 0.0
    %1981 = vmatprep.subr.mxu0 0.0
    %1982 = vmatpush2.msra.mxu0 0.0
    %1983 = vmatprep.subr.mxu0 0.0
    %1984 = vmatpush2.msra.mxu0 0.0
    %1985 = vmatprep.subr.mxu0 0.0
    %1986 = vmatpush2.msra.mxu0 0.0
    %1987 = vmatprep.subr.mxu0 0.0
    %1988 = vmatpush2.msra.mxu0 0.0
    %1989 = vmatprep.subr.mxu0 0.0
    %1990 = vmatpush2.msra.mxu0 0.0
    %1991 = vmatprep.subr.mxu0 0.0
    %1992 = vmatpush2.msra.mxu0 0.0
    %1993 = vmatprep.subr.mxu0 0.0
    %1994 = vmatpush2.msra.mxu0 0.0
    %1995 = vmatprep.subr.mxu0 0.0
    %1996 = vmatpush2.msra.mxu0 0.0
    %1997 = vmatprep.subr.mxu0 0.0
    %1998 = vmatpush2.msra.mxu0 0.0
    %1999 = vmatprep.subr.mxu0 0.0
    %2000 = vmatpush2.msra.mxu0 0.0
    %2001 = vmatprep.mubr.f32.mxu0 0.0
    %2002 = vmatmul.mubr.f32.gmra.mxu0 %v1932
    %v2003 = vpop.f32.mrf.mxu0
    %v2004 = vadd.f32 %v1929, %v2003
    %v2005 = vpop.f32.mrf.mxu0
    %2006 = vmatprep.mubr.f32.mxu0 0.0
    %2007 = vmatmul.mubr.f32.gmra.mxu0 %v1935
    %v2008 = vpop.f32.mrf.mxu0
    %v2009 = vadd.f32 %v1929, %v2008
    %v2010 = vpop.f32.mrf.mxu0
    %2011 = vdwg.mxu0
    %v2012 = vmax.f32 %v2004, 0.0
    %v2013 = vmax.f32 %v2009, 0.0
    %v2014 = vld [vmem:[%s10] sm:$0xff]
    %v2015 = vld [vmem:[%s10 + $0x8] sm:$0xff]
    %v2016 = vld [vmem:[%s10 + $0x10] sm:$0xff]
    %v2017 = vld [vmem:[%s10 + $0x18] sm:$0xff]
    %v2018 = vld [vmem:[%s10 + $0x20] sm:$0xff]
    %v2019 = vld [vmem:[%s10 + $0x28] sm:$0xff]
    %v2020 = vld [vmem:[%s10 + $0x30] sm:$0xff]
    %v2021 = vld [vmem:[%s10 + $0x38] sm:$0xff]
    %v2022 = vld [vmem:[%s11] sm:$0x1]
    %v2024 = vlaneseq
    %v2025 = vshrl.u32 %v2024, 7
    %v2026 = vsub.s32 0, %v2025
    %v2027 = vrot.slane %v2022, %v2026
    %vm2029 = vcmask 523264
    %v2031 = vsel %vm2029, %v2012, 0
    %v2034 = vsel %vm2029, %v2013, 0
    %2036 = vmatprep.subr.mxu0 0.0
    %2037 = vmatpush1.msra.mxu0 0.0
    %2038 = vmatprep.subr.mxu0 0.0
    %2039 = vmatpush1.msra.mxu0 0.0
    %2040 = vmatprep.subr.mxu0 0.0
    %2041 = vmatpush1.msra.mxu0 0.0
    %2042 = vmatprep.subr.mxu0 0.0
    %2043 = vmatpush1.msra.mxu0 0.0
    %2044 = vmatprep.subr.mxu0 0.0
    %2045 = vmatpush1.msra.mxu0 0.0
    %2046 = vmatprep.subr.mxu0 0.0
    %2047 = vmatpush1.msra.mxu0 0.0
    %2048 = vmatprep.subr.mxu0 0.0
    %2049 = vmatpush1.msra.mxu0 0.0
    %2050 = vmatprep.subr.mxu0 0.0
    %2051 = vmatpush1.msra.mxu0 0.0
    %2052 = vmatprep.subr.mxu0 0.0
    %2053 = vmatpush1.msra.mxu0 %v2021
    %2054 = vmatprep.subr.mxu0 0.0
    %2055 = vmatpush1.msra.mxu0 %v2020
    %2056 = vmatprep.subr.mxu0 0.0
    %2057 = vmatpush1.msra.mxu0 %v2019
    %2058 = vmatprep.subr.mxu0 0.0
    %2059 = vmatpush1.msra.mxu0 %v2018
    %2060 = vmatprep.subr.mxu0 0.0
    %2061 = vmatpush1.msra.mxu0 %v2017
    %2062 = vmatprep.subr.mxu0 0.0
    %2063 = vmatpush1.msra.mxu0 %v2016
    %2064 = vmatprep.subr.mxu0 0.0
    %2065 = vmatpush1.msra.mxu0 %v2015
    %2066 = vmatprep.subr.mxu0 0.0
    %2067 = vmatpush1.msra.mxu0 %v2014
    %2068 = vmatprep.subr.mxu0 0.0
    %2069 = vmatpush2.msra.mxu0 0.0
    %2070 = vmatprep.subr.mxu0 0.0
    %2071 = vmatpush2.msra.mxu0 0.0
    %2072 = vmatprep.subr.mxu0 0.0
    %2073 = vmatpush2.msra.mxu0 0.0
    %2074 = vmatprep.subr.mxu0 0.0
    %2075 = vmatpush2.msra.mxu0 0.0
    %2076 = vmatprep.subr.mxu0 0.0
    %2077 = vmatpush2.msra.mxu0 0.0
    %2078 = vmatprep.subr.mxu0 0.0
    %2079 = vmatpush2.msra.mxu0 0.0
    %2080 = vmatprep.subr.mxu0 0.0
    %2081 = vmatpush2.msra.mxu0 0.0
    %2082 = vmatprep.subr.mxu0 0.0
    %2083 = vmatpush2.msra.mxu0 0.0
    %2084 = vmatprep.subr.mxu0 0.0
    %2085 = vmatpush2.msra.mxu0 0.0
    %2086 = vmatprep.subr.mxu0 0.0
    %2087 = vmatpush2.msra.mxu0 0.0
    %2088 = vmatprep.subr.mxu0 0.0
    %2089 = vmatpush2.msra.mxu0 0.0
    %2090 = vmatprep.subr.mxu0 0.0
    %2091 = vmatpush2.msra.mxu0 0.0
    %2092 = vmatprep.subr.mxu0 0.0
    %2093 = vmatpush2.msra.mxu0 0.0
    %2094 = vmatprep.subr.mxu0 0.0
    %2095 = vmatpush2.msra.mxu0 0.0
    %2096 = vmatprep.subr.mxu0 0.0
    %2097 = vmatpush2.msra.mxu0 0.0
    %2098 = vmatprep.subr.mxu0 0.0
    %2099 = vmatpush2.msra.mxu0 0.0
    %2100 = vmatprep.mubr.f32.mxu0 0.0
    %2101 = vmatmul.mubr.f32.gmra.mxu0 %v2031
    %v2102 = vpop.f32.mrf.mxu0
    %v2103 = vadd.f32 %v2027, %v2102
    %v2104 = vpop.f32.mrf.mxu0
    %2105 = vmatprep.mubr.f32.mxu0 0.0
    %2106 = vmatmul.mubr.f32.gmra.mxu0 %v2034
    %v2107 = vpop.f32.mrf.mxu0
    %v2108 = vadd.f32 %v2027, %v2107
    %v2109 = vpop.f32.mrf.mxu0
    %2110 = vdwg.mxu0
    %v2111 = vadd.f32 %v1888, %v2103
    %v2112 = vadd.f32 %v1889, %v2108
    %2113 = vst.msk [vmem:[#allocation7] sm:$0xff] %vm80, %v2111
    %2114 = vst.msk [vmem:[#allocation7 + $0x8] sm:$0xff] %vm80, %v2112
    // Predicated region
    $region58: #{tpu_custom_call.1} parent=1 // pred_check
      _
    $region59: #{tpu_custom_call.1} parent=1 // pred_check_branch
      %2116 = sbr.rel (0) target = $region61
    $region60: #{tpu_custom_call.1} parent=1 // pred_region
      %s2118 = ssub.s32 256, 256
      %2119 = vsyncadd [#allocation4], %s2118
      %s2120 = sshll.u32 [#allocation7], 4
      %s2121 = int_to_ptr.vmem [resolvable:$true] %s2120
      %2126 = dma.vmem_to_hbm [thread:$0]  %s2121, 256, %s12, [#allocation4], 128, 128, 8
    $region61: #{tpu_custom_call.1} parent=1 // pred_fallthru
      _
    // Predicated region
    $region62: #{tpu_custom_call.1} parent=1 // pred_check
      _
    $region63: #{tpu_custom_call.1} parent=1 // pred_check_branch
      %2128 = sbr.rel (0) target = $region65
    $region64: #{tpu_custom_call.1} parent=1 // pred_region
      %2129 = dma.done [#allocation4], 256
    $region65: #{tpu_custom_call.1} parent=1 // pred_fallthru
      _
    %2130 = vsyncpa [#allocation3], 1
    %2131 = vsyncpa [#allocation6], 1
    %2132 = vsyncpa [#allocation4], 1

</llo_original>
